<compile_context>
chip_gen: v7x
topology: tpu7x:2x2x1
jax: 0.10.0
libtpu: 0.0.40
codegen_flags: <defaults>
</compile_context>

<pallas_src>
import functools

import jax
import jax.numpy as jnp
import numpy as np
from jax import lax
from jax.experimental import pallas as pl
from jax.experimental.pallas import tpu as pltpu

_NEG_LARGE = -1e30  # finite "masked" value: exp underflows to exactly 0


# ------------------------------ Pallas kernel ------------------------------ #

def _mask_attn_kernel(x_ref, wqkv_ref, bqkv_ref, wproj_ref, bproj_ref, o_ref,
                      *, head, qk_dim, v_dim, div):
    x = x_ref[0]                                            # (S, C)
    S = x.shape[0]
    dqk_h = qk_dim // head
    dv_h = v_dim // head
    out_ch = wproj_ref.shape[1]

    # Fused QKV projection: one lane-dense MXU matmul per batch.
    qkv = jnp.dot(x, wqkv_ref[...], preferred_element_type=jnp.float32)
    qkv = qkv + bqkv_ref[...]                               # (S, 2*qk_dim + v_dim)

    # Causal mask, shared across heads.
    row = lax.broadcasted_iota(jnp.int32, (S, S), 0)
    col = lax.broadcasted_iota(jnp.int32, (S, S), 1)
    causal = col <= row

    wproj_t = wproj_ref[...]                                # (v_dim, out_ch)
    acc = jnp.zeros((S, out_ch), jnp.float32)

    # Small, static head count -> unrolled Python loop.
    for h in range(head):
        q = qkv[:, h * dqk_h:(h + 1) * dqk_h] * div         # score scale folded into q
        k = qkv[:, qk_dim + h * dqk_h: qk_dim + (h + 1) * dqk_h]
        v = qkv[:, 2 * qk_dim + h * dv_h: 2 * qk_dim + (h + 1) * dv_h]

        # s = q @ k^T without an explicit in-kernel transpose.
        s = lax.dot_general(q, k, (((1,), (1,)), ((), ())),
                            preferred_element_type=jnp.float32)      # (S, S)
        s = jnp.where(causal, s, _NEG_LARGE)
        m = jnp.max(s, axis=-1, keepdims=True)
        p = jnp.exp(s - m)                                  # masked entries -> 0
        l = jnp.sum(p, axis=-1, keepdims=True)              # (S, 1)

        o = jnp.dot(p, v, preferred_element_type=jnp.float32)        # (S, dv_h)
        # Deferred normalization: (S, dv_h) multiply + EUP reciprocal instead
        # of an (S, S) divide.
        o = o * pl.reciprocal(l, approx=True)

        # Fused output 1x1-conv projection for this head's channel slice.
        acc = acc + jnp.dot(o, wproj_t[h * dv_h:(h + 1) * dv_h, :],
                            preferred_element_type=jnp.float32)

    o_ref[0] = (acc + bproj_ref[...]).astype(o_ref.dtype)


# --------------------------------- wrapper --------------------------------- #

def mask_attention_forward(x_nchw, params, *, head, qk_dim, v_dim):
    """Exact forward pass of MaskAttention. x_nchw: (B, C, H, W) float32."""
    wqkv, bqkv, wproj, bproj = params
    B, C, H, W = x_nchw.shape
    S = H * W
    out_ch = wproj.shape[0]
    div = float(qk_dim // head) ** (-0.5)

    # Layout plumbing (outside the kernel): NCHW -> (B, S, C); pre-transpose
    # the 1x1-conv weights so the kernel contracts the last dim directly.
    x_flat = x_nchw.reshape(B, C, S).transpose(0, 2, 1)     # (B, S, C)
    wqkv_t = wqkv.T                                         # (C, 2*qk_dim + v_dim)
    bqkv_row = bqkv.reshape(1, -1)                          # (1, 2*qk_dim + v_dim)
    wproj_t = wproj.T                                       # (v_dim, out_ch)
    bproj_row = bproj.reshape(1, out_ch)                    # (1, out_ch)

    kernel = functools.partial(_mask_attn_kernel, head=head, qk_dim=qk_dim,
                               v_dim=v_dim, div=div)

    # TODO(synk): for large images (S >~ 2k pixels) switch to a flash-style
    # (B, q-tile, kv-tile) grid with online-softmax VMEM scratch so the (S, S)
    # score matrix never materializes (needed to fit v7x's 64 MiB VMEM).
    y = pl.pallas_call(
        kernel,
        out_shape=jax.ShapeDtypeStruct((B, S, out_ch), jnp.float32),
        grid_spec=pltpu.PrefetchScalarGridSpec(
            num_scalar_prefetch=0,
            grid=(B,),
            in_specs=[
                pl.BlockSpec((1, S, C), lambda b: (b, 0, 0)),
                pl.BlockSpec((C, 2 * qk_dim + v_dim), lambda b: (0, 0)),
                pl.BlockSpec((1, 2 * qk_dim + v_dim), lambda b: (0, 0)),
                pl.BlockSpec((v_dim, out_ch), lambda b: (0, 0)),
                pl.BlockSpec((1, out_ch), lambda b: (0, 0)),
            ],
            out_specs=pl.BlockSpec((1, S, out_ch), lambda b: (b, 0, 0)),
        ),
        compiler_params=pltpu.CompilerParams(
            dimension_semantics=("parallel",)),
    )(x_flat, wqkv_t, bqkv_row, wproj_t, bproj_row)

    # Back to NCHW, as the PyTorch module returns.
    return y.transpose(0, 2, 1).reshape(B, out_ch, H, W)


# ---------------------------- pure-JAX reference ---------------------------- #

def mask_attention_ref(x_nchw, params, *, head, qk_dim, v_dim):
    wqkv, bqkv, wproj, bproj = params
    B, C, H, W = x_nchw.shape
    S = H * W
    div = float(qk_dim // head) ** (-0.5)

    xf = x_nchw.reshape(B, C, S)
    qkv = jnp.einsum("oc,bcs->bos", wqkv, xf) + bqkv[None, :, None]
    q, k, v = jnp.split(qkv, [qk_dim, 2 * qk_dim], axis=1)

    def resh(s):
        ch = s.shape[1]
        return s.reshape(B, head, ch // head, S).transpose(0, 1, 3, 2)

    q, k, v = resh(q), resh(k), resh(v)
    attn = jnp.einsum("bhqd,bhkd->bhqk", q, k) * div
    mask = jnp.tril(jnp.ones((S, S)))
    attn = jnp.where(mask == 0, -jnp.inf, attn)
    attn = jax.nn.softmax(attn, axis=-1)
    attn = jnp.where(mask == 0, 0.0, attn)
    out = jnp.einsum("bhqk,bhkd->bhqd", attn, v)
    out = out.transpose(0, 1, 3, 2).reshape(B, head * (v_dim // head), H, W)
    y = jnp.einsum("oc,bchw->bohw", wproj, out) + bproj[None, :, None, None]
    return y


# ----------------------------------- main ----------------------------------- #

if __name__ == "__main__":
    B, in_ch, H, W = 2, 4, 8, 8
    head, qk_dim, v_dim, out_ch = 2, 8, 8, 4

    key = jax.random.PRNGKey(0)
    kx, kw1, kb1, kw2, kb2 = jax.random.split(key, 5)

    x = jax.random.normal(kx, (B, in_ch, H, W), dtype=jnp.float32)

    # Conv2d(in_ch, 2*qk_dim + v_dim, 1) and Conv2d(v_dim, out_ch, 1) weights,
    # stored as (out, in) matrices (1x1 kernels).
    wqkv = 0.1 * jax.random.normal(kw1, (2 * qk_dim + v_dim, in_ch), jnp.float32)
    bqkv = 0.1 * jax.random.normal(kb1, (2 * qk_dim + v_dim,), jnp.float32)
    wproj = 0.1 * jax.random.normal(kw2, (out_ch, v_dim), jnp.float32)
    bproj = 0.1 * jax.random.normal(kb2, (out_ch,), jnp.float32)
    params = (wqkv, bqkv, wproj, bproj)

    y = mask_attention_forward(x, params, head=head, qk_dim=qk_dim, v_dim=v_dim)
    y = jax.block_until_ready(y)

    y_ref = mask_attention_ref(x, params, head=head, qk_dim=qk_dim, v_dim=v_dim)
    np.testing.assert_allclose(np.asarray(y), np.asarray(y_ref),
                               rtol=1e-3, atol=1e-3)

    assert y.shape == (B, out_ch, H, W)
    print("KERNEL_OK")
</pallas_src>

<mosaic_0001>
module attributes {stable_mosaic.version = 11 : i64} {
  func.func @_mask_attn_kernel(%arg0: i32, %arg1: memref<1x64x4xf32, #tpu.memory_space<vmem>>, %arg2: memref<4x24xf32, #tpu.memory_space<vmem>>, %arg3: memref<1x24xf32, #tpu.memory_space<vmem>>, %arg4: memref<8x4xf32, #tpu.memory_space<vmem>>, %arg5: memref<1x4xf32, #tpu.memory_space<vmem>>, %arg6: memref<1x64x4xf32, #tpu.memory_space<vmem>>) attributes {dimension_semantics = [#tpu.dimension_semantics<parallel>], iteration_bounds = array<i64: 2>, scalar_prefetch = 0 : i64, scratch_operands = 0 : i64, tpu.core_type = #tpu.core_type<tc>, window_params = [{transform_indices = @transform_0, window_bounds = array<i64: 1, 64, 4>}, {pipeline_mode = #tpu.pipeline_mode<synchronous>, transform_indices = @transform_1, window_bounds = array<i64: 4, 24>}, {pipeline_mode = #tpu.pipeline_mode<synchronous>, transform_indices = @transform_2, window_bounds = array<i64: 1, 24>}, {pipeline_mode = #tpu.pipeline_mode<synchronous>, transform_indices = @transform_3, window_bounds = array<i64: 8, 4>}, {pipeline_mode = #tpu.pipeline_mode<synchronous>, transform_indices = @transform_4, window_bounds = array<i64: 1, 4>}, {transform_indices = @transform_5, window_bounds = array<i64: 1, 64, 4>}]} {
    %c0 = arith.constant 0 : index
    %c0_0 = arith.constant 0 : index
    %c0_1 = arith.constant 0 : index
    %0 = vector.load %arg1[%c0, %c0_0, %c0_1] : memref<1x64x4xf32, #tpu.memory_space<vmem>>, vector<1x64x4xf32>
    %1 = vector.shape_cast %0 : vector<1x64x4xf32> to vector<64x4xf32>
    %c0_2 = arith.constant 0 : index
    %c0_3 = arith.constant 0 : index
    %2 = vector.load %arg2[%c0_2, %c0_3] : memref<4x24xf32, #tpu.memory_space<vmem>>, vector<4x24xf32>
    %cst = arith.constant dense<0.000000e+00> : vector<64x24xf32>
    %3 = tpu.matmul %1, %2, %cst {dimension_numbers = #tpu.dot_dimension_numbers<[1], [0], [0], [1], [0, 0, 1, 1], [], []>} : vector<64x4xf32>, vector<4x24xf32>, vector<64x24xf32> -> vector<64x24xf32>
    %c0_4 = arith.constant 0 : index
    %c0_5 = arith.constant 0 : index
    %4 = vector.load %arg3[%c0_4, %c0_5] : memref<1x24xf32, #tpu.memory_space<vmem>>, vector<1x24xf32>
    %5 = vector.broadcast %4 : vector<1x24xf32> to vector<64x24xf32>
    %6 = arith.addf %3, %5 : vector<64x24xf32>
    %7 = tpu.iota {dimensions = array<i32: 0>} : vector<64x64xi32>
    %8 = tpu.iota {dimensions = array<i32: 1>} : vector<64x64xi32>
    %9 = arith.cmpi sle, %8, %7 : vector<64x64xi32>
    %c0_6 = arith.constant 0 : index
    %c0_7 = arith.constant 0 : index
    %10 = vector.load %arg4[%c0_6, %c0_7] : memref<8x4xf32, #tpu.memory_space<vmem>>, vector<8x4xf32>
    %cst_8 = arith.constant 0.000000e+00 : f32
    %11 = vector.broadcast %cst_8 : f32 to vector<64x4xf32>
    %12 = vector.extract_strided_slice %6 {offsets = [0, 0], sizes = [64, 4], strides = [1, 1]} : vector<64x24xf32> to vector<64x4xf32>
    %cst_9 = arith.constant 5.000000e-01 : f32
    %13 = vector.broadcast %cst_9 : f32 to vector<64x4xf32>
    %14 = arith.mulf %12, %13 : vector<64x4xf32>
    %15 = vector.extract_strided_slice %6 {offsets = [0, 8], sizes = [64, 4], strides = [1, 1]} : vector<64x24xf32> to vector<64x4xf32>
    %16 = vector.extract_strided_slice %6 {offsets = [0, 16], sizes = [64, 4], strides = [1, 1]} : vector<64x24xf32> to vector<64x4xf32>
    %cst_10 = arith.constant dense<0.000000e+00> : vector<64x64xf32>
    %17 = tpu.matmul %14, %15, %cst_10 {dimension_numbers = #tpu.dot_dimension_numbers<[1], [1], [0], [0], [0, 0, 1, 0], [], []>} : vector<64x4xf32>, vector<64x4xf32>, vector<64x64xf32> -> vector<64x64xf32>
    %cst_11 = arith.constant -1.000000e+30 : f32
    %18 = vector.broadcast %cst_11 : f32 to vector<64x64xf32>
    %19 = arith.select %9, %17, %18 : vector<64x64xi1>, vector<64x64xf32>
    %cst_12 = arith.constant dense<0xFF800000> : vector<64xf32>
    %20 = vector.multi_reduction <maximumf>, %19, %cst_12 [1] : vector<64x64xf32> to vector<64xf32>
    %21 = vector.shape_cast %20 : vector<64xf32> to vector<64x1xf32>
    %22 = vector.broadcast %21 : vector<64x1xf32> to vector<64x64xf32>
    %23 = arith.subf %19, %22 : vector<64x64xf32>
    %24 = math.exp %23 : vector<64x64xf32>
    %cst_13 = arith.constant dense<0.000000e+00> : vector<64xf32>
    %25 = vector.multi_reduction <add>, %24, %cst_13 [1] : vector<64x64xf32> to vector<64xf32>
    %26 = vector.shape_cast %25 : vector<64xf32> to vector<64x1xf32>
    %cst_14 = arith.constant dense<0.000000e+00> : vector<64x4xf32>
    %27 = tpu.matmul %24, %16, %cst_14 {dimension_numbers = #tpu.dot_dimension_numbers<[1], [0], [0], [1], [0, 0, 1, 1], [], []>} : vector<64x64xf32>, vector<64x4xf32>, vector<64x4xf32> -> vector<64x4xf32>
    %28 = tpu.reciprocal %26 {approx = true} : vector<64x1xf32> -> vector<64x1xf32>
    %29 = vector.broadcast %28 : vector<64x1xf32> to vector<64x4xf32>
    %30 = arith.mulf %27, %29 : vector<64x4xf32>
    %31 = vector.extract_strided_slice %10 {offsets = [0, 0], sizes = [4, 4], strides = [1, 1]} : vector<8x4xf32> to vector<4x4xf32>
    %cst_15 = arith.constant dense<0.000000e+00> : vector<64x4xf32>
    %32 = tpu.matmul %30, %31, %cst_15 {dimension_numbers = #tpu.dot_dimension_numbers<[1], [0], [0], [1], [0, 0, 1, 1], [], []>} : vector<64x4xf32>, vector<4x4xf32>, vector<64x4xf32> -> vector<64x4xf32>
    %33 = arith.addf %11, %32 : vector<64x4xf32>
    %34 = vector.extract_strided_slice %6 {offsets = [0, 4], sizes = [64, 4], strides = [1, 1]} : vector<64x24xf32> to vector<64x4xf32>
    %cst_16 = arith.constant 5.000000e-01 : f32
    %35 = vector.broadcast %cst_16 : f32 to vector<64x4xf32>
    %36 = arith.mulf %34, %35 : vector<64x4xf32>
    %37 = vector.extract_strided_slice %6 {offsets = [0, 12], sizes = [64, 4], strides = [1, 1]} : vector<64x24xf32> to vector<64x4xf32>
    %38 = vector.extract_strided_slice %6 {offsets = [0, 20], sizes = [64, 4], strides = [1, 1]} : vector<64x24xf32> to vector<64x4xf32>
    %cst_17 = arith.constant dense<0.000000e+00> : vector<64x64xf32>
    %39 = tpu.matmul %36, %37, %cst_17 {dimension_numbers = #tpu.dot_dimension_numbers<[1], [1], [0], [0], [0, 0, 1, 0], [], []>} : vector<64x4xf32>, vector<64x4xf32>, vector<64x64xf32> -> vector<64x64xf32>
    %cst_18 = arith.constant -1.000000e+30 : f32
    %40 = vector.broadcast %cst_18 : f32 to vector<64x64xf32>
    %41 = arith.select %9, %39, %40 : vector<64x64xi1>, vector<64x64xf32>
    %cst_19 = arith.constant dense<0xFF800000> : vector<64xf32>
    %42 = vector.multi_reduction <maximumf>, %41, %cst_19 [1] : vector<64x64xf32> to vector<64xf32>
    %43 = vector.shape_cast %42 : vector<64xf32> to vector<64x1xf32>
    %44 = vector.broadcast %43 : vector<64x1xf32> to vector<64x64xf32>
    %45 = arith.subf %41, %44 : vector<64x64xf32>
    %46 = math.exp %45 : vector<64x64xf32>
    %cst_20 = arith.constant dense<0.000000e+00> : vector<64xf32>
    %47 = vector.multi_reduction <add>, %46, %cst_20 [1] : vector<64x64xf32> to vector<64xf32>
    %48 = vector.shape_cast %47 : vector<64xf32> to vector<64x1xf32>
    %cst_21 = arith.constant dense<0.000000e+00> : vector<64x4xf32>
    %49 = tpu.matmul %46, %38, %cst_21 {dimension_numbers = #tpu.dot_dimension_numbers<[1], [0], [0], [1], [0, 0, 1, 1], [], []>} : vector<64x64xf32>, vector<64x4xf32>, vector<64x4xf32> -> vector<64x4xf32>
    %50 = tpu.reciprocal %48 {approx = true} : vector<64x1xf32> -> vector<64x1xf32>
    %51 = vector.broadcast %50 : vector<64x1xf32> to vector<64x4xf32>
    %52 = arith.mulf %49, %51 : vector<64x4xf32>
    %53 = vector.extract_strided_slice %10 {offsets = [4, 0], sizes = [4, 4], strides = [1, 1]} : vector<8x4xf32> to vector<4x4xf32>
    %cst_22 = arith.constant dense<0.000000e+00> : vector<64x4xf32>
    %54 = tpu.matmul %52, %53, %cst_22 {dimension_numbers = #tpu.dot_dimension_numbers<[1], [0], [0], [1], [0, 0, 1, 1], [], []>} : vector<64x4xf32>, vector<4x4xf32>, vector<64x4xf32> -> vector<64x4xf32>
    %55 = arith.addf %33, %54 : vector<64x4xf32>
    %c0_23 = arith.constant 0 : index
    %c0_24 = arith.constant 0 : index
    %56 = vector.load %arg5[%c0_23, %c0_24] : memref<1x4xf32, #tpu.memory_space<vmem>>, vector<1x4xf32>
    %57 = vector.broadcast %56 : vector<1x4xf32> to vector<64x4xf32>
    %58 = arith.addf %55, %57 : vector<64x4xf32>
    %c0_25 = arith.constant 0 : index
    %c0_26 = arith.constant 0 : index
    %c0_27 = arith.constant 0 : index
    %59 = vector.load %arg6[%c0_25, %c0_26, %c0_27] : memref<1x64x4xf32, #tpu.memory_space<vmem>>, vector<1x64x4xf32>
    %60 = vector.shape_cast %59 : vector<1x64x4xf32> to vector<64x4xf32>
    %61 = vector.shape_cast %58 : vector<64x4xf32> to vector<1x64x4xf32>
    tpu.vector_store %arg6[%c0_25, %c0_26, %c0_27], %61 {strides = array<i32>} : memref<1x64x4xf32, #tpu.memory_space<vmem>>, vector<1x64x4xf32>,
    return
  }
  func.func @transform_0(%arg0: i32) -> (i32, i32, i32) {
    %c0_i32 = arith.constant 0 : i32
    %c0_i32_0 = arith.constant 0 : i32
    %c0_i32_1 = arith.constant 0 : i32
    return %arg0, %c0_i32, %c0_i32_0 : i32, i32, i32
  }
  func.func @transform_1(%arg0: i32) -> (i32, i32) {
    %c0_i32 = arith.constant 0 : i32
    %c0_i32_0 = arith.constant 0 : i32
    %c0_i32_1 = arith.constant 0 : i32
    return %c0_i32, %c0_i32_0 : i32, i32
  }
  func.func @transform_2(%arg0: i32) -> (i32, i32) {
    %c0_i32 = arith.constant 0 : i32
    %c0_i32_0 = arith.constant 0 : i32
    %c0_i32_1 = arith.constant 0 : i32
    return %c0_i32, %c0_i32_0 : i32, i32
  }
  func.func @transform_3(%arg0: i32) -> (i32, i32) {
    %c0_i32 = arith.constant 0 : i32
    %c0_i32_0 = arith.constant 0 : i32
    %c0_i32_1 = arith.constant 0 : i32
    return %c0_i32, %c0_i32_0 : i32, i32
  }
  func.func @transform_4(%arg0: i32) -> (i32, i32) {
    %c0_i32 = arith.constant 0 : i32
    %c0_i32_0 = arith.constant 0 : i32
    %c0_i32_1 = arith.constant 0 : i32
    return %c0_i32, %c0_i32_0 : i32, i32
  }
  func.func @transform_5(%arg0: i32) -> (i32, i32, i32) {
    %c0_i32 = arith.constant 0 : i32
    %c0_i32_0 = arith.constant 0 : i32
    %c0_i32_1 = arith.constant 0 : i32
    return %arg0, %c0_i32, %c0_i32_0 : i32, i32, i32
  }
}

</mosaic_0001>

<llo_original>
// kernel: tpu_custom_call.1
$region0: #{tpu_custom_call.1}
  #allocation0 [shape = 'u32[]', space=smem, size = 0x4, offset = 0x4, fixed_abs, tag = 'smem constant byte address 0x4 - core index']
  #allocation1 [shape = 'u32[144,128]{1,0:T(1,128)}', space=vmem, size = 0x12000, scoped, tag = 'internal scratch']
  %s0 = inlined_call_operand.vmem [shape: f32[2,64,4], index: 0, kind: input, shape index: {}]
  %s1 = inlined_call_operand.vmem [shape: f32[4,24], index: 1, kind: input, shape index: {}]
  %s2 = inlined_call_operand.vmem [shape: f32[1,24], index: 2, kind: input, shape index: {}]
  %s3 = inlined_call_operand.vmem [shape: f32[8,4], index: 3, kind: input, shape index: {}]
  %s4 = inlined_call_operand.vmem [shape: f32[1,4], index: 4, kind: input, shape index: {}]
  %s5 = inlined_call_operand.vmem [shape: f32[2,64,4], index: 5, kind: output, shape index: {}]
  %s6 = sld [smem:[#allocation0]]
  $region53: #{tpu_custom_call.1} parent=0
    _
  %s8 = ssub.s32 1, %s6
  %s9 = scalar_select 0, %s8, %s6
  loop: start=0, step=1, limit=4
  $region2: #{tpu_custom_call.1} parent=0 // loop_pre_header
    _
  $region3: #{tpu_custom_call.1} parent=0 // loop_header
    %s11 = sphi 0, %s15
    %p12 = scmp.ge.s32.totalorder %s11, 4
    %s21 = sphi 0, %s23
    %s24 = sphi 0, %s21
    %s25 = sphi 0, %s24
    %s41 = sphi 0, %s25
    %s45 = sphi 0, %s45
    %s47 = sphi 0, %s45
    %s48 = sphi 0, %s47
    %s62 = sphi 0, %s48
    %s66 = sphi 0, %s66
    %s68 = sphi 0, %s66
    %s69 = sphi 0, %s68
    %s83 = sphi 0, %s69
    %s87 = sphi 0, %s87
    %s89 = sphi 0, %s87
    %s90 = sphi 0, %s89
    %s104 = sphi 0, %s90
    %s108 = sphi 0, %s108
    %s110 = sphi 0, %s108
    %s111 = sphi 0, %s110
    %s125 = sphi 0, %s111
    %s131 = sphi 0, %s133
    %s134 = sphi 0, %s131
    %s135 = sphi 0, %s134
    %s151 = sphi 0, %s135
  $region4: #{tpu_custom_call.1} parent=0 // loop_header_branch
    %14 = sbr.rel (%p12) target = $region8
  $region5: #{tpu_custom_call.1} parent=0 // loop_body
    %s16 = ssub.s32 %s11, 1
    %s17 = ssub.s32 %s11, 2
    %s18 = sadd.s32 %s11, 1
    %s19 = ssub.s32 %s11, %s18
    %p20 = scmp.eq.s32.totalorder %s19, 0
    %s22 = sadd.s32 %s21, 1
    %s23 = scalar_select %p20, %s21, %s22
    %p26 = pneg %p20
    %p27 = scmp.eq.s32.totalorder %s11, 1
    %p28 = por %p26, %p27
    %p29 = scmp.ne.s32.totalorder %s21, %s24
    %p30 = scmp.eq.s32.totalorder %s11, 0
    %p31 = por %p29, %p30
    %p32 = scmp.ne.s32.totalorder %s21, %s24
    %p33 = scmp.eq.s32.totalorder %s16, 1
    %p34 = por %p32, %p33
    %p35 = scmp.ne.s32.totalorder %s24, %s25
    %p36 = scmp.eq.s32.totalorder %s16, 0
    %p37 = por %p35, %p36
    %p38 = scmp.ne.s32.totalorder %s24, %s25
    %p39 = scmp.eq.s32.totalorder %s17, 1
    %p40 = por %p38, %p39
    %p42 = scmp.ne.s32.totalorder %s25, %s41
    %p43 = scmp.eq.s32.totalorder %s17, 0
    %p44 = por %p42, %p43
    %s46 = sadd.s32 %s45, 1
    %p49 = scmp.eq.s32.totalorder %s11, 1
    %p50 = scmp.ne.s32.totalorder %s45, %s47
    %p51 = scmp.eq.s32.totalorder %s11, 0
    %p52 = por %p50, %p51
    %p53 = scmp.ne.s32.totalorder %s45, %s47
    %p54 = scmp.eq.s32.totalorder %s16, 1
    %p55 = por %p53, %p54
    %p56 = scmp.ne.s32.totalorder %s47, %s48
    %p57 = scmp.eq.s32.totalorder %s16, 0
    %p58 = por %p56, %p57
    %p59 = scmp.ne.s32.totalorder %s47, %s48
    %p60 = scmp.eq.s32.totalorder %s17, 1
    %p61 = por %p59, %p60
    %p63 = scmp.ne.s32.totalorder %s48, %s62
    %p64 = scmp.eq.s32.totalorder %s17, 0
    %p65 = por %p63, %p64
    %s67 = sadd.s32 %s66, 1
    %p70 = scmp.eq.s32.totalorder %s11, 1
    %p71 = scmp.ne.s32.totalorder %s66, %s68
    %p72 = scmp.eq.s32.totalorder %s11, 0
    %p73 = por %p71, %p72
    %p74 = scmp.ne.s32.totalorder %s66, %s68
    %p75 = scmp.eq.s32.totalorder %s16, 1
    %p76 = por %p74, %p75
    %p77 = scmp.ne.s32.totalorder %s68, %s69
    %p78 = scmp.eq.s32.totalorder %s16, 0
    %p79 = por %p77, %p78
    %p80 = scmp.ne.s32.totalorder %s68, %s69
    %p81 = scmp.eq.s32.totalorder %s17, 1
    %p82 = por %p80, %p81
    %p84 = scmp.ne.s32.totalorder %s69, %s83
    %p85 = scmp.eq.s32.totalorder %s17, 0
    %p86 = por %p84, %p85
    %s88 = sadd.s32 %s87, 1
    %p91 = scmp.eq.s32.totalorder %s11, 1
    %p92 = scmp.ne.s32.totalorder %s87, %s89
    %p93 = scmp.eq.s32.totalorder %s11, 0
    %p94 = por %p92, %p93
    %p95 = scmp.ne.s32.totalorder %s87, %s89
    %p96 = scmp.eq.s32.totalorder %s16, 1
    %p97 = por %p95, %p96
    %p98 = scmp.ne.s32.totalorder %s89, %s90
    %p99 = scmp.eq.s32.totalorder %s16, 0
    %p100 = por %p98, %p99
    %p101 = scmp.ne.s32.totalorder %s89, %s90
    %p102 = scmp.eq.s32.totalorder %s17, 1
    %p103 = por %p101, %p102
    %p105 = scmp.ne.s32.totalorder %s90, %s104
    %p106 = scmp.eq.s32.totalorder %s17, 0
    %p107 = por %p105, %p106
    %s109 = sadd.s32 %s108, 1
    %p112 = scmp.eq.s32.totalorder %s11, 1
    %p113 = scmp.ne.s32.totalorder %s108, %s110
    %p114 = scmp.eq.s32.totalorder %s11, 0
    %p115 = por %p113, %p114
    %p116 = scmp.ne.s32.totalorder %s108, %s110
    %p117 = scmp.eq.s32.totalorder %s16, 1
    %p118 = por %p116, %p117
    %p119 = scmp.ne.s32.totalorder %s110, %s111
    %p120 = scmp.eq.s32.totalorder %s16, 0
    %p121 = por %p119, %p120
    %p122 = scmp.ne.s32.totalorder %s110, %s111
    %p123 = scmp.eq.s32.totalorder %s17, 1
    %p124 = por %p122, %p123
    %p126 = scmp.ne.s32.totalorder %s111, %s125
    %p127 = scmp.eq.s32.totalorder %s17, 0
    %p128 = por %p126, %p127
    %s129 = ssub.s32 %s11, %s18
    %p130 = scmp.eq.s32.totalorder %s129, 0
    %s132 = sadd.s32 %s131, 1
    %s133 = scalar_select %p130, %s131, %s132
    %p136 = pneg %p130
    %p137 = scmp.eq.s32.totalorder %s11, 1
    %p138 = por %p136, %p137
    %p139 = scmp.ne.s32.totalorder %s131, %s134
    %p140 = scmp.eq.s32.totalorder %s11, 0
    %p141 = por %p139, %p140
    %p142 = scmp.ne.s32.totalorder %s131, %s134
    %p143 = scmp.eq.s32.totalorder %s16, 1
    %p144 = por %p142, %p143
    %p145 = scmp.ne.s32.totalorder %s134, %s135
    %p146 = scmp.eq.s32.totalorder %s16, 0
    %p147 = por %p145, %p146
    %p148 = scmp.ne.s32.totalorder %s134, %s135
    %p149 = scmp.eq.s32.totalorder %s17, 1
    %p150 = por %p148, %p149
    %p152 = scmp.ne.s32.totalorder %s135, %s151
    %p153 = scmp.eq.s32.totalorder %s17, 0
    %p154 = por %p152, %p153
    %p155 = scmp.le.s32.totalorder 1, %s11
    %p156 = scmp.lt.s32.totalorder %s11, 3
    %p157 = pnand %p155, %p156
    %p158 = pneg %p157
    // Predicated region
    $region9: #{tpu_custom_call.1} parent=5 // pred_check
      _
    $region10: #{tpu_custom_call.1} parent=5 // pred_check_branch
      %160 = sbr.rel (%p157) target = $region12
    $region11: #{tpu_custom_call.1} parent=5 // pred_region
      %s161 = ssub.s32 %s11, 1
      // Predicated region
      $region13: #{tpu_custom_call.1} parent=11 // pred_check
        %p162 = pneg %p58
      $region14: #{tpu_custom_call.1} parent=11 // pred_check_branch
        %164 = sbr.rel (%p162) target = $region16
      $region15: #{tpu_custom_call.1} parent=11 // pred_region
        _
      $region16: #{tpu_custom_call.1} parent=11 // pred_fallthru
        _
      // Predicated region
      $region17: #{tpu_custom_call.1} parent=11 // pred_check
        %p165 = pneg %p79
      $region18: #{tpu_custom_call.1} parent=11 // pred_check_branch
        %167 = sbr.rel (%p165) target = $region20
      $region19: #{tpu_custom_call.1} parent=11 // pred_region
        _
      $region20: #{tpu_custom_call.1} parent=11 // pred_fallthru
        _
      // Predicated region
      $region21: #{tpu_custom_call.1} parent=11 // pred_check
        %p168 = pneg %p100
      $region22: #{tpu_custom_call.1} parent=11 // pred_check_branch
        %170 = sbr.rel (%p168) target = $region24
      $region23: #{tpu_custom_call.1} parent=11 // pred_region
        _
      $region24: #{tpu_custom_call.1} parent=11 // pred_fallthru
        _
      // Predicated region
      $region25: #{tpu_custom_call.1} parent=11 // pred_check
        %p171 = pneg %p121
      $region26: #{tpu_custom_call.1} parent=11 // pred_check_branch
        %173 = sbr.rel (%p171) target = $region28
      $region27: #{tpu_custom_call.1} parent=11 // pred_region
        _
      $region28: #{tpu_custom_call.1} parent=11 // pred_fallthru
        _
    $region12: #{tpu_custom_call.1} parent=5 // pred_fallthru
      _
    %p174 = scmp.lt.s32.totalorder %s11, 2
    // Predicated region
    $region29: #{tpu_custom_call.1} parent=5 // pred_check
      %p175 = pneg %p174
    $region30: #{tpu_custom_call.1} parent=5 // pred_check_branch
      %177 = sbr.rel (%p175) target = $region32
    $region31: #{tpu_custom_call.1} parent=5 // pred_region
      // Predicated region
      $region33: #{tpu_custom_call.1} parent=31 // pred_check
        %p178 = pneg %p31
      $region34: #{tpu_custom_call.1} parent=31 // pred_check_branch
        %180 = sbr.rel (%p178) target = $region36
      $region35: #{tpu_custom_call.1} parent=31 // pred_region
        %p181 = scmp.lt.s32.totalorder %s11, 1
        %s182 = scalar_select %p181, %s11, 1
        %s183 = smul.addr %s182, 8
        %s184 = smul.addr %s183, 8
        %s185 = scalar_lea.vmem %s0, %s184
      $region36: #{tpu_custom_call.1} parent=31 // pred_fallthru
        _
    $region32: #{tpu_custom_call.1} parent=5 // pred_fallthru
      _
    %p186 = scmp.le.s32.totalorder 1, %s11
    %p187 = scmp.lt.s32.totalorder %s11, 3
    %p188 = pnand %p186, %p187
    %p189 = pneg %p188
    // Predicated region
    $region37: #{tpu_custom_call.1} parent=5 // pred_check
      _
    $region38: #{tpu_custom_call.1} parent=5 // pred_check_branch
      %191 = sbr.rel (%p188) target = $region40
    $region39: #{tpu_custom_call.1} parent=5 // pred_region
      %s192 = ssub.s32 %s11, 1
      %p193 = scmp.lt.s32.totalorder %s16, 1
      %s194 = scalar_select %p193, %s16, 1
      %s195 = smul.addr %s194, 8
      %s196 = smul.addr %s195, 8
      %s197 = scalar_lea.vmem %s0, %s196
      %p198 = pneg %p37
      %p199 = pneg %p34
      %p200 = pneg %p58
      %p201 = pneg %p55
      %p202 = pneg %p79
      %p203 = pneg %p76
      %p204 = pneg %p100
      %p205 = pneg %p97
      %p206 = pneg %p121
      %p207 = pneg %p118
      %p208 = pneg %p147
      %p209 = pneg %p144
      %p210 = scmp.lt.s32.totalorder %s16, 1
      %s211 = scalar_select %p210, %s16, 1
      %s212 = smul.addr %s211, 8
      %s213 = smul.addr %s212, 8
      %s214 = scalar_lea.vmem %s5, %s213
      %p215 = scmp.lt.s32.totalorder %s16, 1
      %s216 = scalar_select %p215, %s16, 1
      %s217 = smul.addr %s216, 8
      %s218 = smul.addr %s217, 8
      %s219 = scalar_lea.vmem %s0, %s218
      %p220 = scmp.lt.s32.totalorder %s16, 1
      %s221 = scalar_select %p220, %s16, 1
      %s222 = smul.addr %s221, 8
      %s223 = smul.addr %s222, 8
      %s224 = scalar_lea.vmem %s5, %s223
      %v225 = vld [vmem:[%s219] sm:$0xff]
      %v226 = vld [vmem:[%s219 + $0x8] sm:$0xff]
      %v227 = vld [vmem:[%s219 + $0x10] sm:$0xff]
      %v228 = vld [vmem:[%s219 + $0x18] sm:$0xff]
      %v229 = vld [vmem:[%s219 + $0x20] sm:$0xff]
      %v230 = vld [vmem:[%s219 + $0x28] sm:$0xff]
      %v231 = vld [vmem:[%s219 + $0x30] sm:$0xff]
      %v232 = vld [vmem:[%s219 + $0x38] sm:$0xff]
      %v233 = vld [vmem:[%s1] sm:$0xf]
      %v234 = vld [vmem:[%s2] sm:$0x1]
      %v236 = vlaneseq
      %v237 = vshrl.u32 %v236, 7
      %v238 = vsub.s32 0, %v237
      %v239 = vrot.slane %v234, %v238
      %vm241 = vcmask 31744
      %v243 = vsel %vm241, %v225, 0
      %v246 = vsel %vm241, %v226, 0
      %v249 = vsel %vm241, %v227, 0
      %v252 = vsel %vm241, %v228, 0
      %v255 = vsel %vm241, %v229, 0
      %v258 = vsel %vm241, %v230, 0
      %v261 = vsel %vm241, %v231, 0
      %v264 = vsel %vm241, %v232, 0
      %vm266 = vcmask 1043456
      %v268 = vsel %vm266, %v233, 0
      %270 = vmatprep.subr.mxu0 0.0
      %271 = vmatpush1.msra.mxu0 %v268
      %272 = vmatprep.subr.mxu0 0.0
      %273 = vmatpush1.msra.mxu0 0.0
      %274 = vmatprep.subr.mxu0 0.0
      %275 = vmatpush1.msra.mxu0 0.0
      %276 = vmatprep.subr.mxu0 0.0
      %277 = vmatpush1.msra.mxu0 0.0
      %278 = vmatprep.subr.mxu0 0.0
      %279 = vmatpush1.msra.mxu0 0.0
      %280 = vmatprep.subr.mxu0 0.0
      %281 = vmatpush1.msra.mxu0 0.0
      %282 = vmatprep.subr.mxu0 0.0
      %283 = vmatpush1.msra.mxu0 0.0
      %284 = vmatprep.subr.mxu0 0.0
      %285 = vmatpush1.msra.mxu0 0.0
      %286 = vmatprep.subr.mxu0 0.0
      %287 = vmatpush1.msra.mxu0 0.0
      %288 = vmatprep.subr.mxu0 0.0
      %289 = vmatpush1.msra.mxu0 0.0
      %290 = vmatprep.subr.mxu0 0.0
      %291 = vmatpush1.msra.mxu0 0.0
      %292 = vmatprep.subr.mxu0 0.0
      %293 = vmatpush1.msra.mxu0 0.0
      %294 = vmatprep.subr.mxu0 0.0
      %295 = vmatpush1.msra.mxu0 0.0
      %296 = vmatprep.subr.mxu0 0.0
      %297 = vmatpush1.msra.mxu0 0.0
      %298 = vmatprep.subr.mxu0 0.0
      %299 = vmatpush1.msra.mxu0 0.0
      %300 = vmatprep.subr.mxu0 0.0
      %301 = vmatpush1.msra.mxu0 0.0
      %302 = vmatprep.subr.mxu0 0.0
      %303 = vmatpush1.msra.mxu0 0.0
      %304 = vmatprep.subr.mxu0 0.0
      %305 = vmatpush1.msra.mxu0 0.0
      %306 = vmatprep.subr.mxu0 0.0
      %307 = vmatpush1.msra.mxu0 0.0
      %308 = vmatprep.subr.mxu0 0.0
      %309 = vmatpush1.msra.mxu0 0.0
      %310 = vmatprep.subr.mxu0 0.0
      %311 = vmatpush1.msra.mxu0 0.0
      %312 = vmatprep.subr.mxu0 0.0
      %313 = vmatpush1.msra.mxu0 0.0
      %314 = vmatprep.subr.mxu0 0.0
      %315 = vmatpush1.msra.mxu0 0.0
      %316 = vmatprep.subr.mxu0 0.0
      %317 = vmatpush1.msra.mxu0 0.0
      %318 = vmatprep.subr.mxu0 0.0
      %319 = vmatpush1.msra.mxu0 0.0
      %320 = vmatprep.subr.mxu0 0.0
      %321 = vmatpush1.msra.mxu0 0.0
      %322 = vmatprep.subr.mxu0 0.0
      %323 = vmatpush1.msra.mxu0 0.0
      %324 = vmatprep.subr.mxu0 0.0
      %325 = vmatpush1.msra.mxu0 0.0
      %326 = vmatprep.subr.mxu0 0.0
      %327 = vmatpush1.msra.mxu0 0.0
      %328 = vmatprep.subr.mxu0 0.0
      %329 = vmatpush1.msra.mxu0 0.0
      %330 = vmatprep.subr.mxu0 0.0
      %331 = vmatpush1.msra.mxu0 0.0
      %332 = vmatprep.subr.mxu0 0.0
      %333 = vmatpush1.msra.mxu0 0.0
      %334 = vmatprep.mubr.f32.mxu0 0.0
      %335 = vmatmul.mubr.f32.gmra.mrb[0].mxu0 %v243
      %v336 = vpop.f32.mrb[0].mxu0
      %v337 = vadd.f32 %v239, %v336
      %v338 = vpop.f32.mrb[0].mxu0
      %339 = vmatprep.mubr.f32.mxu0 0.0
      %340 = vmatmul.mubr.f32.gmra.mrb[0].mxu0 %v246
      %v341 = vpop.f32.mrb[0].mxu0
      %v342 = vadd.f32 %v239, %v341
      %v343 = vpop.f32.mrb[0].mxu0
      %344 = vmatprep.mubr.f32.mxu0 0.0
      %345 = vmatmul.mubr.f32.gmra.mrb[0].mxu0 %v249
      %v346 = vpop.f32.mrb[0].mxu0
      %v347 = vadd.f32 %v239, %v346
      %v348 = vpop.f32.mrb[0].mxu0
      %349 = vmatprep.mubr.f32.mxu0 0.0
      %350 = vmatmul.mubr.f32.gmra.mrb[0].mxu0 %v252
      %v351 = vpop.f32.mrb[0].mxu0
      %v352 = vadd.f32 %v239, %v351
      %v353 = vpop.f32.mrb[0].mxu0
      %354 = vmatprep.mubr.f32.mxu0 0.0
      %355 = vmatmul.mubr.f32.gmra.mrb[0].mxu0 %v255
      %v356 = vpop.f32.mrb[0].mxu0
      %v357 = vadd.f32 %v239, %v356
      %v358 = vpop.f32.mrb[0].mxu0
      %359 = vmatprep.mubr.f32.mxu0 0.0
      %360 = vmatmul.mubr.f32.gmra.mrb[0].mxu0 %v258
      %v361 = vpop.f32.mrb[0].mxu0
      %v362 = vadd.f32 %v239, %v361
      %v363 = vpop.f32.mrb[0].mxu0
      %364 = vmatprep.mubr.f32.mxu0 0.0
      %365 = vmatmul.mubr.f32.gmra.mrb[0].mxu0 %v261
      %v366 = vpop.f32.mrb[0].mxu0
      %v367 = vadd.f32 %v239, %v366
      %v368 = vpop.f32.mrb[0].mxu0
      %369 = vmatprep.mubr.f32.mxu0 0.0
      %370 = vmatmul.mubr.f32.gmra.mrb[0].mxu0 %v264
      %v371 = vpop.f32.mrb[0].mxu0
      %v372 = vadd.f32 %v239, %v371
      %v373 = vpop.f32.mrb[0].mxu0
      %374 = vdwg.mxu0
      %v375 = vlaneseq
      %v376 = vshrl.u32 %v375, 7
      %v377 = vadd.s32 %v376, 8
      %v378 = vadd.s32 %v376, 16
      %v379 = vadd.s32 %v376, 24
      %v380 = vadd.s32 %v376, 32
      %v381 = vadd.s32 %v376, 40
      %v382 = vadd.s32 %v376, 48
      %v383 = vadd.s32 %v376, 56
      %v384 = vlaneseq
      %v385 = vand.u32 %v384, 127
      %vm386 = vcmp.le.s32.totalorder %v385, %v376
      %vm387 = vcmp.le.s32.totalorder %v385, %v377
      %vm388 = vcmp.le.s32.totalorder %v385, %v378
      %vm389 = vcmp.le.s32.totalorder %v385, %v379
      %vm390 = vcmp.le.s32.totalorder %v385, %v380
      %vm391 = vcmp.le.s32.totalorder %v385, %v381
      %vm392 = vcmp.le.s32.totalorder %v385, %v382
      %vm393 = vcmp.le.s32.totalorder %v385, %v383
      %v394 = vld [vmem:[%s3] sm:$0xff]
      %v395 = vmul.f32 %v337, 0.5
      %v396 = vmul.f32 %v342, 0.5
      %v397 = vmul.f32 %v347, 0.5
      %v398 = vmul.f32 %v352, 0.5
      %v399 = vmul.f32 %v357, 0.5
      %v400 = vmul.f32 %v362, 0.5
      %v401 = vmul.f32 %v367, 0.5
      %v402 = vmul.f32 %v372, 0.5
      %411 = vrot.lane.b32.xlu0 %v337, 120
      %v412 = vpop.permute.xlu0 %411
      %413 = vrot.lane.b32.xlu0 %v342, 120
      %v414 = vpop.permute.xlu0 %413
      %415 = vrot.lane.b32.xlu0 %v347, 120
      %v416 = vpop.permute.xlu0 %415
      %417 = vrot.lane.b32.xlu0 %v352, 120
      %v418 = vpop.permute.xlu0 %417
      %419 = vrot.lane.b32.xlu0 %v357, 120
      %v420 = vpop.permute.xlu0 %419
      %421 = vrot.lane.b32.xlu0 %v362, 120
      %v422 = vpop.permute.xlu0 %421
      %423 = vrot.lane.b32.xlu0 %v367, 120
      %v424 = vpop.permute.xlu0 %423
      %425 = vrot.lane.b32.xlu0 %v372, 120
      %v426 = vpop.permute.xlu0 %425
      %v428 = vsel %vm241, %v395, 0
      %v431 = vsel %vm241, %v396, 0
      %v434 = vsel %vm241, %v397, 0
      %v437 = vsel %vm241, %v398, 0
      %v440 = vsel %vm241, %v399, 0
      %v443 = vsel %vm241, %v400, 0
      %v446 = vsel %vm241, %v401, 0
      %v449 = vsel %vm241, %v402, 0
      %v451 = vsel %vm241, %v412, 0
      %v453 = vsel %vm241, %v414, 0
      %v455 = vsel %vm241, %v416, 0
      %v457 = vsel %vm241, %v418, 0
      %v459 = vsel %vm241, %v420, 0
      %v461 = vsel %vm241, %v422, 0
      %v463 = vsel %vm241, %v424, 0
      %v465 = vsel %vm241, %v426, 0
      %467 = vmatprep.subr.mxu0 0.0
      %468 = vmatpush1.xpose.msra.mxu0 %v451
      %469 = vmatprep.subr.mxu0 0.0
      %470 = vmatpush1.xpose.msra.mxu0 %v453
      %471 = vmatprep.subr.mxu0 0.0
      %472 = vmatpush1.xpose.msra.mxu0 %v455
      %473 = vmatprep.subr.mxu0 0.0
      %474 = vmatpush1.xpose.msra.mxu0 %v457
      %475 = vmatprep.subr.mxu0 0.0
      %476 = vmatpush1.xpose.msra.mxu0 %v459
      %477 = vmatprep.subr.mxu0 0.0
      %478 = vmatpush1.xpose.msra.mxu0 %v461
      %479 = vmatprep.subr.mxu0 0.0
      %480 = vmatpush1.xpose.msra.mxu0 %v463
      %481 = vmatprep.subr.mxu0 0.0
      %482 = vmatpush1.xpose.msra.mxu0 %v465
      %483 = vmatprep.subr.mxu0 0.0
      %484 = vmatpush1.xpose.msra.mxu0 0.0
      %485 = vmatprep.subr.mxu0 0.0
      %486 = vmatpush1.xpose.msra.mxu0 0.0
      %487 = vmatprep.subr.mxu0 0.0
      %488 = vmatpush1.xpose.msra.mxu0 0.0
      %489 = vmatprep.subr.mxu0 0.0
      %490 = vmatpush1.xpose.msra.mxu0 0.0
      %491 = vmatprep.subr.mxu0 0.0
      %492 = vmatpush1.xpose.msra.mxu0 0.0
      %493 = vmatprep.subr.mxu0 0.0
      %494 = vmatpush1.xpose.msra.mxu0 0.0
      %495 = vmatprep.subr.mxu0 0.0
      %496 = vmatpush1.xpose.msra.mxu0 0.0
      %497 = vmatprep.subr.mxu0 0.0
      %498 = vmatpush1.xpose.msra.mxu0 0.0
      %499 = vmatprep.subr.mxu0 0.0
      %500 = vmatpush1.xpose.msra.mxu0 0.0
      %501 = vmatprep.subr.mxu0 0.0
      %502 = vmatpush1.xpose.msra.mxu0 0.0
      %503 = vmatprep.subr.mxu0 0.0
      %504 = vmatpush1.xpose.msra.mxu0 0.0
      %505 = vmatprep.subr.mxu0 0.0
      %506 = vmatpush1.xpose.msra.mxu0 0.0
      %507 = vmatprep.subr.mxu0 0.0
      %508 = vmatpush1.xpose.msra.mxu0 0.0
      %509 = vmatprep.subr.mxu0 0.0
      %510 = vmatpush1.xpose.msra.mxu0 0.0
      %511 = vmatprep.subr.mxu0 0.0
      %512 = vmatpush1.xpose.msra.mxu0 0.0
      %513 = vmatprep.subr.mxu0 0.0
      %514 = vmatpush1.xpose.msra.mxu0 0.0
      %515 = vmatprep.subr.mxu0 0.0
      %516 = vmatpush1.xpose.msra.mxu0 0.0
      %517 = vmatprep.subr.mxu0 0.0
      %518 = vmatpush1.xpose.msra.mxu0 0.0
      %519 = vmatprep.subr.mxu0 0.0
      %520 = vmatpush1.xpose.msra.mxu0 0.0
      %521 = vmatprep.subr.mxu0 0.0
      %522 = vmatpush1.xpose.msra.mxu0 0.0
      %523 = vmatprep.subr.mxu0 0.0
      %524 = vmatpush1.xpose.msra.mxu0 0.0
      %525 = vmatprep.subr.mxu0 0.0
      %526 = vmatpush1.xpose.msra.mxu0 0.0
      %527 = vmatprep.subr.mxu0 0.0
      %528 = vmatpush1.xpose.msra.mxu0 0.0
      %529 = vmatprep.subr.mxu0 0.0
      %530 = vmatpush1.xpose.msra.mxu0 0.0
      %531 = vmatprep.mubr.f32.mxu0 0.0
      %532 = vmatmul.mubr.f32.gmra.mrb[0].mxu0 %v428
      %v533 = vpop.f32.mrb[0].mxu0
      %v534 = vadd.f32 0.0, %v533
      %v535 = vpop.f32.mrb[0].mxu0
      %536 = vmatprep.mubr.f32.mxu0 0.0
      %537 = vmatmul.mubr.f32.gmra.mrb[0].mxu0 %v431
      %v538 = vpop.f32.mrb[0].mxu0
      %v539 = vadd.f32 0.0, %v538
      %v540 = vpop.f32.mrb[0].mxu0
      %541 = vmatprep.mubr.f32.mxu0 0.0
      %542 = vmatmul.mubr.f32.gmra.mrb[0].mxu0 %v434
      %v543 = vpop.f32.mrb[0].mxu0
      %v544 = vadd.f32 0.0, %v543
      %v545 = vpop.f32.mrb[0].mxu0
      %546 = vmatprep.mubr.f32.mxu0 0.0
      %547 = vmatmul.mubr.f32.gmra.mrb[0].mxu0 %v437
      %v548 = vpop.f32.mrb[0].mxu0
      %v549 = vadd.f32 0.0, %v548
      %v550 = vpop.f32.mrb[0].mxu0
      %551 = vmatprep.mubr.f32.mxu0 0.0
      %552 = vmatmul.mubr.f32.gmra.mrb[0].mxu0 %v440
      %v553 = vpop.f32.mrb[0].mxu0
      %v554 = vadd.f32 0.0, %v553
      %v555 = vpop.f32.mrb[0].mxu0
      %556 = vmatprep.mubr.f32.mxu0 0.0
      %557 = vmatmul.mubr.f32.gmra.mrb[0].mxu0 %v443
      %v558 = vpop.f32.mrb[0].mxu0
      %v559 = vadd.f32 0.0, %v558
      %v560 = vpop.f32.mrb[0].mxu0
      %561 = vmatprep.mubr.f32.mxu0 0.0
      %562 = vmatmul.mubr.f32.gmra.mrb[0].mxu0 %v446
      %v563 = vpop.f32.mrb[0].mxu0
      %v564 = vadd.f32 0.0, %v563
      %v565 = vpop.f32.mrb[0].mxu0
      %566 = vmatprep.mubr.f32.mxu0 0.0
      %567 = vmatmul.mubr.f32.gmra.mrb[0].mxu0 %v449
      %v568 = vpop.f32.mrb[0].mxu0
      %v569 = vadd.f32 0.0, %v568
      %v570 = vpop.f32.mrb[0].mxu0
      %571 = vdwg.mxu0
      %v572 = vsel %vm386, %v534, -1e+30
      %v573 = vsel %vm387, %v539, -1e+30
      %v574 = vsel %vm388, %v544, -1e+30
      %v575 = vsel %vm389, %v549, -1e+30
      %v576 = vsel %vm390, %v554, -1e+30
      %v577 = vsel %vm391, %v559, -1e+30
      %v578 = vsel %vm392, %v564, -1e+30
      %v579 = vsel %vm393, %v569, -1e+30
      %vm580 = vcmask 523264
      %v581 = vsel %vm580, %v572, -inf
      %582 = vmax.xlane.f32.xlu0 %v581
      %v583 = vpop.xlane.xlu0 %582
      %v584 = vsel %vm580, %v573, -inf
      %585 = vmax.xlane.f32.xlu0 %v584
      %v586 = vpop.xlane.xlu0 %585
      %v587 = vsel %vm580, %v574, -inf
      %588 = vmax.xlane.f32.xlu0 %v587
      %v589 = vpop.xlane.xlu0 %588
      %v590 = vsel %vm580, %v575, -inf
      %591 = vmax.xlane.f32.xlu0 %v590
      %v592 = vpop.xlane.xlu0 %591
      %v593 = vsel %vm580, %v576, -inf
      %594 = vmax.xlane.f32.xlu0 %v593
      %v595 = vpop.xlane.xlu0 %594
      %v596 = vsel %vm580, %v577, -inf
      %597 = vmax.xlane.f32.xlu0 %v596
      %v598 = vpop.xlane.xlu0 %597
      %v599 = vsel %vm580, %v578, -inf
      %600 = vmax.xlane.f32.xlu0 %v599
      %v601 = vpop.xlane.xlu0 %600
      %v602 = vsel %vm580, %v579, -inf
      %603 = vmax.xlane.f32.xlu0 %v602
      %v604 = vpop.xlane.xlu0 %603
      %v605 = vsub.f32 %v572, %v583
      %v606 = vsub.f32 %v573, %v586
      %v607 = vsub.f32 %v574, %v589
      %v608 = vsub.f32 %v575, %v592
      %v609 = vsub.f32 %v576, %v595
      %v610 = vsub.f32 %v577, %v598
      %v611 = vsub.f32 %v578, %v601
      %v612 = vsub.f32 %v579, %v604
      %v613 = vmul.f32 %v605, 1.442695
      %v614 = vpow.pop %v613
      %v615 = vmul.f32 %v606, 1.442695
      %v616 = vpow.pop %v615
      %v617 = vmul.f32 %v607, 1.442695
      %v618 = vpow.pop %v617
      %v619 = vmul.f32 %v608, 1.442695
      %v620 = vpow.pop %v619
      %v621 = vmul.f32 %v609, 1.442695
      %v622 = vpow.pop %v621
      %v623 = vmul.f32 %v610, 1.442695
      %v624 = vpow.pop %v623
      %v625 = vmul.f32 %v611, 1.442695
      %v626 = vpow.pop %v625
      %v627 = vmul.f32 %v612, 1.442695
      %v628 = vpow.pop %v627
      %v629 = vsel %vm580, %v614, 0.0
      %630 = vadd.xlane.f32.xlu0 %v629
      %v631 = vpop.xlane.xlu0 %630
      %v632 = vsel %vm580, %v616, 0.0
      %633 = vadd.xlane.f32.xlu0 %v632
      %v634 = vpop.xlane.xlu0 %633
      %v635 = vsel %vm580, %v618, 0.0
      %636 = vadd.xlane.f32.xlu0 %v635
      %v637 = vpop.xlane.xlu0 %636
      %v638 = vsel %vm580, %v620, 0.0
      %639 = vadd.xlane.f32.xlu0 %v638
      %v640 = vpop.xlane.xlu0 %639
      %v641 = vsel %vm580, %v622, 0.0
      %642 = vadd.xlane.f32.xlu0 %v641
      %v643 = vpop.xlane.xlu0 %642
      %v644 = vsel %vm580, %v624, 0.0
      %645 = vadd.xlane.f32.xlu0 %v644
      %v646 = vpop.xlane.xlu0 %645
      %v647 = vsel %vm580, %v626, 0.0
      %648 = vadd.xlane.f32.xlu0 %v647
      %v649 = vpop.xlane.xlu0 %648
      %v650 = vsel %vm580, %v628, 0.0
      %651 = vadd.xlane.f32.xlu0 %v650
      %v652 = vpop.xlane.xlu0 %651
      %653 = vrot.lane.b32.xlu0 %v337, 112
      %v654 = vpop.permute.xlu0 %653
      %655 = vrot.lane.b32.xlu0 %v342, 112
      %v656 = vpop.permute.xlu0 %655
      %657 = vrot.lane.b32.xlu0 %v347, 112
      %v658 = vpop.permute.xlu0 %657
      %659 = vrot.lane.b32.xlu0 %v352, 112
      %v660 = vpop.permute.xlu0 %659
      %661 = vrot.lane.b32.xlu0 %v357, 112
      %v662 = vpop.permute.xlu0 %661
      %663 = vrot.lane.b32.xlu0 %v362, 112
      %v664 = vpop.permute.xlu0 %663
      %665 = vrot.lane.b32.xlu0 %v367, 112
      %v666 = vpop.permute.xlu0 %665
      %667 = vrot.lane.b32.xlu0 %v372, 112
      %v668 = vpop.permute.xlu0 %667
      %v678 = vsel %vm580, %v614, 0
      %v681 = vsel %vm580, %v616, 0
      %v684 = vsel %vm580, %v618, 0
      %v687 = vsel %vm580, %v620, 0
      %v690 = vsel %vm580, %v622, 0
      %v693 = vsel %vm580, %v624, 0
      %v696 = vsel %vm580, %v626, 0
      %v699 = vsel %vm580, %v628, 0
      %701 = vmatprep.subr.mxu0 0.0
      %702 = vmatpush1.msra.mxu0 %v654
      %703 = vmatprep.subr.mxu0 0.0
      %704 = vmatpush1.msra.mxu0 %v656
      %705 = vmatprep.subr.mxu0 0.0
      %706 = vmatpush1.msra.mxu0 %v658
      %707 = vmatprep.subr.mxu0 0.0
      %708 = vmatpush1.msra.mxu0 %v660
      %709 = vmatprep.subr.mxu0 0.0
      %710 = vmatpush1.msra.mxu0 %v662
      %711 = vmatprep.subr.mxu0 0.0
      %712 = vmatpush1.msra.mxu0 %v664
      %713 = vmatprep.subr.mxu0 0.0
      %714 = vmatpush1.msra.mxu0 %v666
      %715 = vmatprep.subr.mxu0 0.0
      %716 = vmatpush1.msra.mxu0 %v668
      %717 = vmatprep.subr.mxu0 0.0
      %718 = vmatpush1.msra.mxu0 0.0
      %719 = vmatprep.subr.mxu0 0.0
      %720 = vmatpush1.msra.mxu0 0.0
      %721 = vmatprep.subr.mxu0 0.0
      %722 = vmatpush1.msra.mxu0 0.0
      %723 = vmatprep.subr.mxu0 0.0
      %724 = vmatpush1.msra.mxu0 0.0
      %725 = vmatprep.subr.mxu0 0.0
      %726 = vmatpush1.msra.mxu0 0.0
      %727 = vmatprep.subr.mxu0 0.0
      %728 = vmatpush1.msra.mxu0 0.0
      %729 = vmatprep.subr.mxu0 0.0
      %730 = vmatpush1.msra.mxu0 0.0
      %731 = vmatprep.subr.mxu0 0.0
      %732 = vmatpush1.msra.mxu0 0.0
      %733 = vmatprep.subr.mxu0 0.0
      %734 = vmatpush1.msra.mxu0 0.0
      %735 = vmatprep.subr.mxu0 0.0
      %736 = vmatpush1.msra.mxu0 0.0
      %737 = vmatprep.subr.mxu0 0.0
      %738 = vmatpush1.msra.mxu0 0.0
      %739 = vmatprep.subr.mxu0 0.0
      %740 = vmatpush1.msra.mxu0 0.0
      %741 = vmatprep.subr.mxu0 0.0
      %742 = vmatpush1.msra.mxu0 0.0
      %743 = vmatprep.subr.mxu0 0.0
      %744 = vmatpush1.msra.mxu0 0.0
      %745 = vmatprep.subr.mxu0 0.0
      %746 = vmatpush1.msra.mxu0 0.0
      %747 = vmatprep.subr.mxu0 0.0
      %748 = vmatpush1.msra.mxu0 0.0
      %749 = vmatprep.subr.mxu0 0.0
      %750 = vmatpush1.msra.mxu0 0.0
      %751 = vmatprep.subr.mxu0 0.0
      %752 = vmatpush1.msra.mxu0 0.0
      %753 = vmatprep.subr.mxu0 0.0
      %754 = vmatpush1.msra.mxu0 0.0
      %755 = vmatprep.subr.mxu0 0.0
      %756 = vmatpush1.msra.mxu0 0.0
      %757 = vmatprep.subr.mxu0 0.0
      %758 = vmatpush1.msra.mxu0 0.0
      %759 = vmatprep.subr.mxu0 0.0
      %760 = vmatpush1.msra.mxu0 0.0
      %761 = vmatprep.subr.mxu0 0.0
      %762 = vmatpush1.msra.mxu0 0.0
      %763 = vmatprep.subr.mxu0 0.0
      %764 = vmatpush1.msra.mxu0 0.0
      %765 = vmatprep.mubr.f32.mxu0 0.0
      %766 = vmatmul.mubr.f32.gmra.mrb[0].mxu0 %v678
      %v767 = vpop.f32.mrb[0].mxu0
      %v768 = vadd.f32 0.0, %v767
      %v769 = vpop.f32.mrb[0].mxu0
      %770 = vmatprep.mubr.f32.mxu0 0.0
      %771 = vmatmul.mubr.f32.gmra.mrb[0].mxu0 %v681
      %v772 = vpop.f32.mrb[0].mxu0
      %v773 = vadd.f32 0.0, %v772
      %v774 = vpop.f32.mrb[0].mxu0
      %775 = vmatprep.mubr.f32.mxu0 0.0
      %776 = vmatmul.mubr.f32.gmra.mrb[0].mxu0 %v684
      %v777 = vpop.f32.mrb[0].mxu0
      %v778 = vadd.f32 0.0, %v777
      %v779 = vpop.f32.mrb[0].mxu0
      %780 = vmatprep.mubr.f32.mxu0 0.0
      %781 = vmatmul.mubr.f32.gmra.mrb[0].mxu0 %v687
      %v782 = vpop.f32.mrb[0].mxu0
      %v783 = vadd.f32 0.0, %v782
      %v784 = vpop.f32.mrb[0].mxu0
      %785 = vmatprep.mubr.f32.mxu0 0.0
      %786 = vmatmul.mubr.f32.gmra.mrb[0].mxu0 %v690
      %v787 = vpop.f32.mrb[0].mxu0
      %v788 = vadd.f32 0.0, %v787
      %v789 = vpop.f32.mrb[0].mxu0
      %790 = vmatprep.mubr.f32.mxu0 0.0
      %791 = vmatmul.mubr.f32.gmra.mrb[0].mxu0 %v693
      %v792 = vpop.f32.mrb[0].mxu0
      %v793 = vadd.f32 0.0, %v792
      %v794 = vpop.f32.mrb[0].mxu0
      %795 = vmatprep.mubr.f32.mxu0 0.0
      %796 = vmatmul.mubr.f32.gmra.mrb[0].mxu0 %v696
      %v797 = vpop.f32.mrb[0].mxu0
      %v798 = vadd.f32 0.0, %v797
      %v799 = vpop.f32.mrb[0].mxu0
      %800 = vmatprep.mubr.f32.mxu0 0.0
      %801 = vmatmul.mubr.f32.gmra.mrb[0].mxu0 %v699
      %v802 = vpop.f32.mrb[0].mxu0
      %v803 = vadd.f32 0.0, %v802
      %v804 = vpop.f32.mrb[0].mxu0
      %805 = vdwg.mxu0
      %v806 = vrcp.pop %v631
      %v807 = vrcp.pop %v634
      %v808 = vrcp.pop %v637
      %v809 = vrcp.pop %v640
      %v810 = vrcp.pop %v643
      %v811 = vrcp.pop %v646
      %v812 = vrcp.pop %v649
      %v813 = vrcp.pop %v652
      %v814 = vmul.f32 %v768, %v806
      %v815 = vmul.f32 %v773, %v807
      %v816 = vmul.f32 %v778, %v808
      %v817 = vmul.f32 %v783, %v809
      %v818 = vmul.f32 %v788, %v810
      %v819 = vmul.f32 %v793, %v811
      %v820 = vmul.f32 %v798, %v812
      %v821 = vmul.f32 %v803, %v813
      %822 = vrot.lane.b32.xlu0 %v395, 124
      %v823 = vpop.permute.xlu0 %822
      %824 = vrot.lane.b32.xlu0 %v396, 124
      %v825 = vpop.permute.xlu0 %824
      %826 = vrot.lane.b32.xlu0 %v397, 124
      %v827 = vpop.permute.xlu0 %826
      %828 = vrot.lane.b32.xlu0 %v398, 124
      %v829 = vpop.permute.xlu0 %828
      %830 = vrot.lane.b32.xlu0 %v399, 124
      %v831 = vpop.permute.xlu0 %830
      %832 = vrot.lane.b32.xlu0 %v400, 124
      %v833 = vpop.permute.xlu0 %832
      %834 = vrot.lane.b32.xlu0 %v401, 124
      %v835 = vpop.permute.xlu0 %834
      %836 = vrot.lane.b32.xlu0 %v402, 124
      %v837 = vpop.permute.xlu0 %836
      %838 = vrot.lane.b32.xlu0 %v337, 116
      %v839 = vpop.permute.xlu0 %838
      %840 = vrot.lane.b32.xlu0 %v342, 116
      %v841 = vpop.permute.xlu0 %840
      %842 = vrot.lane.b32.xlu0 %v347, 116
      %v843 = vpop.permute.xlu0 %842
      %844 = vrot.lane.b32.xlu0 %v352, 116
      %v845 = vpop.permute.xlu0 %844
      %846 = vrot.lane.b32.xlu0 %v357, 116
      %v847 = vpop.permute.xlu0 %846
      %848 = vrot.lane.b32.xlu0 %v362, 116
      %v849 = vpop.permute.xlu0 %848
      %850 = vrot.lane.b32.xlu0 %v367, 116
      %v851 = vpop.permute.xlu0 %850
      %852 = vrot.lane.b32.xlu0 %v372, 116
      %v853 = vpop.permute.xlu0 %852
      %v854 = vsel %vm241, %v823, 0
      %v856 = vsel %vm241, %v825, 0
      %v858 = vsel %vm241, %v827, 0
      %v860 = vsel %vm241, %v829, 0
      %v862 = vsel %vm241, %v831, 0
      %v864 = vsel %vm241, %v833, 0
      %v866 = vsel %vm241, %v835, 0
      %v868 = vsel %vm241, %v837, 0
      %v870 = vsel %vm241, %v839, 0
      %v872 = vsel %vm241, %v841, 0
      %v874 = vsel %vm241, %v843, 0
      %v876 = vsel %vm241, %v845, 0
      %v878 = vsel %vm241, %v847, 0
      %v880 = vsel %vm241, %v849, 0
      %v882 = vsel %vm241, %v851, 0
      %v884 = vsel %vm241, %v853, 0
      %886 = vmatprep.subr.mxu0 0.0
      %887 = vmatpush1.xpose.msra.mxu0 %v870
      %888 = vmatprep.subr.mxu0 0.0
      %889 = vmatpush1.xpose.msra.mxu0 %v872
      %890 = vmatprep.subr.mxu0 0.0
      %891 = vmatpush1.xpose.msra.mxu0 %v874
      %892 = vmatprep.subr.mxu0 0.0
      %893 = vmatpush1.xpose.msra.mxu0 %v876
      %894 = vmatprep.subr.mxu0 0.0
      %895 = vmatpush1.xpose.msra.mxu0 %v878
      %896 = vmatprep.subr.mxu0 0.0
      %897 = vmatpush1.xpose.msra.mxu0 %v880
      %898 = vmatprep.subr.mxu0 0.0
      %899 = vmatpush1.xpose.msra.mxu0 %v882
      %900 = vmatprep.subr.mxu0 0.0
      %901 = vmatpush1.xpose.msra.mxu0 %v884
      %902 = vmatprep.subr.mxu0 0.0
      %903 = vmatpush1.xpose.msra.mxu0 0.0
      %904 = vmatprep.subr.mxu0 0.0
      %905 = vmatpush1.xpose.msra.mxu0 0.0
      %906 = vmatprep.subr.mxu0 0.0
      %907 = vmatpush1.xpose.msra.mxu0 0.0
      %908 = vmatprep.subr.mxu0 0.0
      %909 = vmatpush1.xpose.msra.mxu0 0.0
      %910 = vmatprep.subr.mxu0 0.0
      %911 = vmatpush1.xpose.msra.mxu0 0.0
      %912 = vmatprep.subr.mxu0 0.0
      %913 = vmatpush1.xpose.msra.mxu0 0.0
      %914 = vmatprep.subr.mxu0 0.0
      %915 = vmatpush1.xpose.msra.mxu0 0.0
      %916 = vmatprep.subr.mxu0 0.0
      %917 = vmatpush1.xpose.msra.mxu0 0.0
      %918 = vmatprep.subr.mxu0 0.0
      %919 = vmatpush1.xpose.msra.mxu0 0.0
      %920 = vmatprep.subr.mxu0 0.0
      %921 = vmatpush1.xpose.msra.mxu0 0.0
      %922 = vmatprep.subr.mxu0 0.0
      %923 = vmatpush1.xpose.msra.mxu0 0.0
      %924 = vmatprep.subr.mxu0 0.0
      %925 = vmatpush1.xpose.msra.mxu0 0.0
      %926 = vmatprep.subr.mxu0 0.0
      %927 = vmatpush1.xpose.msra.mxu0 0.0
      %928 = vmatprep.subr.mxu0 0.0
      %929 = vmatpush1.xpose.msra.mxu0 0.0
      %930 = vmatprep.subr.mxu0 0.0
      %931 = vmatpush1.xpose.msra.mxu0 0.0
      %932 = vmatprep.subr.mxu0 0.0
      %933 = vmatpush1.xpose.msra.mxu0 0.0
      %934 = vmatprep.subr.mxu0 0.0
      %935 = vmatpush1.xpose.msra.mxu0 0.0
      %936 = vmatprep.subr.mxu0 0.0
      %937 = vmatpush1.xpose.msra.mxu0 0.0
      %938 = vmatprep.subr.mxu0 0.0
      %939 = vmatpush1.xpose.msra.mxu0 0.0
      %940 = vmatprep.subr.mxu0 0.0
      %941 = vmatpush1.xpose.msra.mxu0 0.0
      %942 = vmatprep.subr.mxu0 0.0
      %943 = vmatpush1.xpose.msra.mxu0 0.0
      %944 = vmatprep.subr.mxu0 0.0
      %945 = vmatpush1.xpose.msra.mxu0 0.0
      %946 = vmatprep.subr.mxu0 0.0
      %947 = vmatpush1.xpose.msra.mxu0 0.0
      %948 = vmatprep.subr.mxu0 0.0
      %949 = vmatpush1.xpose.msra.mxu0 0.0
      %950 = vmatprep.mubr.f32.mxu0 0.0
      %951 = vmatmul.mubr.f32.gmra.mrb[0].mxu0 %v854
      %v952 = vpop.f32.mrb[0].mxu0
      %v953 = vadd.f32 0.0, %v952
      %v954 = vpop.f32.mrb[0].mxu0
      %955 = vmatprep.mubr.f32.mxu0 0.0
      %956 = vmatmul.mubr.f32.gmra.mrb[0].mxu0 %v856
      %v957 = vpop.f32.mrb[0].mxu0
      %v958 = vadd.f32 0.0, %v957
      %v959 = vpop.f32.mrb[0].mxu0
      %960 = vmatprep.mubr.f32.mxu0 0.0
      %961 = vmatmul.mubr.f32.gmra.mrb[0].mxu0 %v858
      %v962 = vpop.f32.mrb[0].mxu0
      %v963 = vadd.f32 0.0, %v962
      %v964 = vpop.f32.mrb[0].mxu0
      %965 = vmatprep.mubr.f32.mxu0 0.0
      %966 = vmatmul.mubr.f32.gmra.mrb[0].mxu0 %v860
      %v967 = vpop.f32.mrb[0].mxu0
      %v968 = vadd.f32 0.0, %v967
      %v969 = vpop.f32.mrb[0].mxu0
      %970 = vmatprep.mubr.f32.mxu0 0.0
      %971 = vmatmul.mubr.f32.gmra.mrb[0].mxu0 %v862
      %v972 = vpop.f32.mrb[0].mxu0
      %v973 = vadd.f32 0.0, %v972
      %v974 = vpop.f32.mrb[0].mxu0
      %975 = vmatprep.mubr.f32.mxu0 0.0
      %976 = vmatmul.mubr.f32.gmra.mrb[0].mxu0 %v864
      %v977 = vpop.f32.mrb[0].mxu0
      %v978 = vadd.f32 0.0, %v977
      %v979 = vpop.f32.mrb[0].mxu0
      %980 = vmatprep.mubr.f32.mxu0 0.0
      %981 = vmatmul.mubr.f32.gmra.mrb[0].mxu0 %v866
      %v982 = vpop.f32.mrb[0].mxu0
      %v983 = vadd.f32 0.0, %v982
      %v984 = vpop.f32.mrb[0].mxu0
      %985 = vmatprep.mubr.f32.mxu0 0.0
      %986 = vmatmul.mubr.f32.gmra.mrb[0].mxu0 %v868
      %v987 = vpop.f32.mrb[0].mxu0
      %v988 = vadd.f32 0.0, %v987
      %v989 = vpop.f32.mrb[0].mxu0
      %990 = vdwg.mxu0
      %v991 = vsel %vm386, %v953, -1e+30
      %v992 = vsel %vm387, %v958, -1e+30
      %v993 = vsel %vm388, %v963, -1e+30
      %v994 = vsel %vm389, %v968, -1e+30
      %v995 = vsel %vm390, %v973, -1e+30
      %v996 = vsel %vm391, %v978, -1e+30
      %v997 = vsel %vm392, %v983, -1e+30
      %v998 = vsel %vm393, %v988, -1e+30
      %v999 = vsel %vm580, %v991, -inf
      %1000 = vmax.xlane.f32.xlu0 %v999
      %v1001 = vpop.xlane.xlu0 %1000
      %v1002 = vsel %vm580, %v992, -inf
      %1003 = vmax.xlane.f32.xlu0 %v1002
      %v1004 = vpop.xlane.xlu0 %1003
      %v1005 = vsel %vm580, %v993, -inf
      %1006 = vmax.xlane.f32.xlu0 %v1005
      %v1007 = vpop.xlane.xlu0 %1006
      %v1008 = vsel %vm580, %v994, -inf
      %1009 = vmax.xlane.f32.xlu0 %v1008
      %v1010 = vpop.xlane.xlu0 %1009
      %v1011 = vsel %vm580, %v995, -inf
      %1012 = vmax.xlane.f32.xlu0 %v1011
      %v1013 = vpop.xlane.xlu0 %1012
      %v1014 = vsel %vm580, %v996, -inf
      %1015 = vmax.xlane.f32.xlu0 %v1014
      %v1016 = vpop.xlane.xlu0 %1015
      %v1017 = vsel %vm580, %v997, -inf
      %1018 = vmax.xlane.f32.xlu0 %v1017
      %v1019 = vpop.xlane.xlu0 %1018
      %v1020 = vsel %vm580, %v998, -inf
      %1021 = vmax.xlane.f32.xlu0 %v1020
      %v1022 = vpop.xlane.xlu0 %1021
      %v1023 = vsub.f32 %v991, %v1001
      %v1024 = vsub.f32 %v992, %v1004
      %v1025 = vsub.f32 %v993, %v1007
      %v1026 = vsub.f32 %v994, %v1010
      %v1027 = vsub.f32 %v995, %v1013
      %v1028 = vsub.f32 %v996, %v1016
      %v1029 = vsub.f32 %v997, %v1019
      %v1030 = vsub.f32 %v998, %v1022
      %v1031 = vmul.f32 %v1023, 1.442695
      %v1032 = vpow.pop %v1031
      %v1033 = vmul.f32 %v1024, 1.442695
      %v1034 = vpow.pop %v1033
      %v1035 = vmul.f32 %v1025, 1.442695
      %v1036 = vpow.pop %v1035
      %v1037 = vmul.f32 %v1026, 1.442695
      %v1038 = vpow.pop %v1037
      %v1039 = vmul.f32 %v1027, 1.442695
      %v1040 = vpow.pop %v1039
      %v1041 = vmul.f32 %v1028, 1.442695
      %v1042 = vpow.pop %v1041
      %v1043 = vmul.f32 %v1029, 1.442695
      %v1044 = vpow.pop %v1043
      %v1045 = vmul.f32 %v1030, 1.442695
      %v1046 = vpow.pop %v1045
      %v1047 = vsel %vm580, %v1032, 0.0
      %1048 = vadd.xlane.f32.xlu0 %v1047
      %v1049 = vpop.xlane.xlu0 %1048
      %v1050 = vsel %vm580, %v1034, 0.0
      %1051 = vadd.xlane.f32.xlu0 %v1050
      %v1052 = vpop.xlane.xlu0 %1051
      %v1053 = vsel %vm580, %v1036, 0.0
      %1054 = vadd.xlane.f32.xlu0 %v1053
      %v1055 = vpop.xlane.xlu0 %1054
      %v1056 = vsel %vm580, %v1038, 0.0
      %1057 = vadd.xlane.f32.xlu0 %v1056
      %v1058 = vpop.xlane.xlu0 %1057
      %v1059 = vsel %vm580, %v1040, 0.0
      %1060 = vadd.xlane.f32.xlu0 %v1059
      %v1061 = vpop.xlane.xlu0 %1060
      %v1062 = vsel %vm580, %v1042, 0.0
      %1063 = vadd.xlane.f32.xlu0 %v1062
      %v1064 = vpop.xlane.xlu0 %1063
      %v1065 = vsel %vm580, %v1044, 0.0
      %1066 = vadd.xlane.f32.xlu0 %v1065
      %v1067 = vpop.xlane.xlu0 %1066
      %v1068 = vsel %vm580, %v1046, 0.0
      %1069 = vadd.xlane.f32.xlu0 %v1068
      %v1070 = vpop.xlane.xlu0 %1069
      %1071 = vrot.lane.b32.xlu0 %v337, 108
      %v1072 = vpop.permute.xlu0 %1071
      %1073 = vrot.lane.b32.xlu0 %v342, 108
      %v1074 = vpop.permute.xlu0 %1073
      %1075 = vrot.lane.b32.xlu0 %v347, 108
      %v1076 = vpop.permute.xlu0 %1075
      %1077 = vrot.lane.b32.xlu0 %v352, 108
      %v1078 = vpop.permute.xlu0 %1077
      %1079 = vrot.lane.b32.xlu0 %v357, 108
      %v1080 = vpop.permute.xlu0 %1079
      %1081 = vrot.lane.b32.xlu0 %v362, 108
      %v1082 = vpop.permute.xlu0 %1081
      %1083 = vrot.lane.b32.xlu0 %v367, 108
      %v1084 = vpop.permute.xlu0 %1083
      %1085 = vrot.lane.b32.xlu0 %v372, 108
      %v1086 = vpop.permute.xlu0 %1085
      %v1096 = vsel %vm580, %v1032, 0
      %v1099 = vsel %vm580, %v1034, 0
      %v1102 = vsel %vm580, %v1036, 0
      %v1105 = vsel %vm580, %v1038, 0
      %v1108 = vsel %vm580, %v1040, 0
      %v1111 = vsel %vm580, %v1042, 0
      %v1114 = vsel %vm580, %v1044, 0
      %v1117 = vsel %vm580, %v1046, 0
      %1119 = vmatprep.subr.mxu0 0.0
      %1120 = vmatpush1.msra.mxu0 %v1072
      %1121 = vmatprep.subr.mxu0 0.0
      %1122 = vmatpush1.msra.mxu0 %v1074
      %1123 = vmatprep.subr.mxu0 0.0
      %1124 = vmatpush1.msra.mxu0 %v1076
      %1125 = vmatprep.subr.mxu0 0.0
      %1126 = vmatpush1.msra.mxu0 %v1078
      %1127 = vmatprep.subr.mxu0 0.0
      %1128 = vmatpush1.msra.mxu0 %v1080
      %1129 = vmatprep.subr.mxu0 0.0
      %1130 = vmatpush1.msra.mxu0 %v1082
      %1131 = vmatprep.subr.mxu0 0.0
      %1132 = vmatpush1.msra.mxu0 %v1084
      %1133 = vmatprep.subr.mxu0 0.0
      %1134 = vmatpush1.msra.mxu0 %v1086
      %1135 = vmatprep.subr.mxu0 0.0
      %1136 = vmatpush1.msra.mxu0 0.0
      %1137 = vmatprep.subr.mxu0 0.0
      %1138 = vmatpush1.msra.mxu0 0.0
      %1139 = vmatprep.subr.mxu0 0.0
      %1140 = vmatpush1.msra.mxu0 0.0
      %1141 = vmatprep.subr.mxu0 0.0
      %1142 = vmatpush1.msra.mxu0 0.0
      %1143 = vmatprep.subr.mxu0 0.0
      %1144 = vmatpush1.msra.mxu0 0.0
      %1145 = vmatprep.subr.mxu0 0.0
      %1146 = vmatpush1.msra.mxu0 0.0
      %1147 = vmatprep.subr.mxu0 0.0
      %1148 = vmatpush1.msra.mxu0 0.0
      %1149 = vmatprep.subr.mxu0 0.0
      %1150 = vmatpush1.msra.mxu0 0.0
      %1151 = vmatprep.subr.mxu0 0.0
      %1152 = vmatpush1.msra.mxu0 0.0
      %1153 = vmatprep.subr.mxu0 0.0
      %1154 = vmatpush1.msra.mxu0 0.0
      %1155 = vmatprep.subr.mxu0 0.0
      %1156 = vmatpush1.msra.mxu0 0.0
      %1157 = vmatprep.subr.mxu0 0.0
      %1158 = vmatpush1.msra.mxu0 0.0
      %1159 = vmatprep.subr.mxu0 0.0
      %1160 = vmatpush1.msra.mxu0 0.0
      %1161 = vmatprep.subr.mxu0 0.0
      %1162 = vmatpush1.msra.mxu0 0.0
      %1163 = vmatprep.subr.mxu0 0.0
      %1164 = vmatpush1.msra.mxu0 0.0
      %1165 = vmatprep.subr.mxu0 0.0
      %1166 = vmatpush1.msra.mxu0 0.0
      %1167 = vmatprep.subr.mxu0 0.0
      %1168 = vmatpush1.msra.mxu0 0.0
      %1169 = vmatprep.subr.mxu0 0.0
      %1170 = vmatpush1.msra.mxu0 0.0
      %1171 = vmatprep.subr.mxu0 0.0
      %1172 = vmatpush1.msra.mxu0 0.0
      %1173 = vmatprep.subr.mxu0 0.0
      %1174 = vmatpush1.msra.mxu0 0.0
      %1175 = vmatprep.subr.mxu0 0.0
      %1176 = vmatpush1.msra.mxu0 0.0
      %1177 = vmatprep.subr.mxu0 0.0
      %1178 = vmatpush1.msra.mxu0 0.0
      %1179 = vmatprep.subr.mxu0 0.0
      %1180 = vmatpush1.msra.mxu0 0.0
      %1181 = vmatprep.subr.mxu0 0.0
      %1182 = vmatpush1.msra.mxu0 0.0
      %1183 = vmatprep.mubr.f32.mxu0 0.0
      %1184 = vmatmul.mubr.f32.gmra.mrb[0].mxu0 %v1096
      %v1185 = vpop.f32.mrb[0].mxu0
      %v1186 = vadd.f32 0.0, %v1185
      %v1187 = vpop.f32.mrb[0].mxu0
      %1188 = vmatprep.mubr.f32.mxu0 0.0
      %1189 = vmatmul.mubr.f32.gmra.mrb[0].mxu0 %v1099
      %v1190 = vpop.f32.mrb[0].mxu0
      %v1191 = vadd.f32 0.0, %v1190
      %v1192 = vpop.f32.mrb[0].mxu0
      %1193 = vmatprep.mubr.f32.mxu0 0.0
      %1194 = vmatmul.mubr.f32.gmra.mrb[0].mxu0 %v1102
      %v1195 = vpop.f32.mrb[0].mxu0
      %v1196 = vadd.f32 0.0, %v1195
      %v1197 = vpop.f32.mrb[0].mxu0
      %1198 = vmatprep.mubr.f32.mxu0 0.0
      %1199 = vmatmul.mubr.f32.gmra.mrb[0].mxu0 %v1105
      %v1200 = vpop.f32.mrb[0].mxu0
      %v1201 = vadd.f32 0.0, %v1200
      %v1202 = vpop.f32.mrb[0].mxu0
      %1203 = vmatprep.mubr.f32.mxu0 0.0
      %1204 = vmatmul.mubr.f32.gmra.mrb[0].mxu0 %v1108
      %v1205 = vpop.f32.mrb[0].mxu0
      %v1206 = vadd.f32 0.0, %v1205
      %v1207 = vpop.f32.mrb[0].mxu0
      %1208 = vmatprep.mubr.f32.mxu0 0.0
      %1209 = vmatmul.mubr.f32.gmra.mrb[0].mxu0 %v1111
      %v1210 = vpop.f32.mrb[0].mxu0
      %v1211 = vadd.f32 0.0, %v1210
      %v1212 = vpop.f32.mrb[0].mxu0
      %1213 = vmatprep.mubr.f32.mxu0 0.0
      %1214 = vmatmul.mubr.f32.gmra.mrb[0].mxu0 %v1114
      %v1215 = vpop.f32.mrb[0].mxu0
      %v1216 = vadd.f32 0.0, %v1215
      %v1217 = vpop.f32.mrb[0].mxu0
      %1218 = vmatprep.mubr.f32.mxu0 0.0
      %1219 = vmatmul.mubr.f32.gmra.mrb[0].mxu0 %v1117
      %v1220 = vpop.f32.mrb[0].mxu0
      %v1221 = vadd.f32 0.0, %v1220
      %v1222 = vpop.f32.mrb[0].mxu0
      %1223 = vdwg.mxu0
      %v1224 = vrcp.pop %v1049
      %v1225 = vrcp.pop %v1052
      %v1226 = vrcp.pop %v1055
      %v1227 = vrcp.pop %v1058
      %v1228 = vrcp.pop %v1061
      %v1229 = vrcp.pop %v1064
      %v1230 = vrcp.pop %v1067
      %v1231 = vrcp.pop %v1070
      %v1232 = vmul.f32 %v1186, %v1224
      %v1233 = vmul.f32 %v1191, %v1225
      %v1234 = vmul.f32 %v1196, %v1226
      %v1235 = vmul.f32 %v1201, %v1227
      %v1236 = vmul.f32 %v1206, %v1228
      %v1237 = vmul.f32 %v1211, %v1229
      %v1238 = vmul.f32 %v1216, %v1230
      %v1239 = vmul.f32 %v1221, %v1231
      %v1241 = vrot.slane %v394, 4
      %v1243 = vsel %vm241, %v1232, 0
      %v1246 = vsel %vm241, %v1233, 0
      %v1249 = vsel %vm241, %v1234, 0
      %v1252 = vsel %vm241, %v1235, 0
      %v1255 = vsel %vm241, %v1236, 0
      %v1258 = vsel %vm241, %v1237, 0
      %v1261 = vsel %vm241, %v1238, 0
      %v1264 = vsel %vm241, %v1239, 0
      %v1266 = vsel %vm266, %v1241, 0
      %1268 = vmatprep.subr.mxu0 0.0
      %1269 = vmatpush1.msra.mxu0 %v1266
      %1270 = vmatprep.subr.mxu0 0.0
      %1271 = vmatpush1.msra.mxu0 0.0
      %1272 = vmatprep.subr.mxu0 0.0
      %1273 = vmatpush1.msra.mxu0 0.0
      %1274 = vmatprep.subr.mxu0 0.0
      %1275 = vmatpush1.msra.mxu0 0.0
      %1276 = vmatprep.subr.mxu0 0.0
      %1277 = vmatpush1.msra.mxu0 0.0
      %1278 = vmatprep.subr.mxu0 0.0
      %1279 = vmatpush1.msra.mxu0 0.0
      %1280 = vmatprep.subr.mxu0 0.0
      %1281 = vmatpush1.msra.mxu0 0.0
      %1282 = vmatprep.subr.mxu0 0.0
      %1283 = vmatpush1.msra.mxu0 0.0
      %1284 = vmatprep.subr.mxu0 0.0
      %1285 = vmatpush1.msra.mxu0 0.0
      %1286 = vmatprep.subr.mxu0 0.0
      %1287 = vmatpush1.msra.mxu0 0.0
      %1288 = vmatprep.subr.mxu0 0.0
      %1289 = vmatpush1.msra.mxu0 0.0
      %1290 = vmatprep.subr.mxu0 0.0
      %1291 = vmatpush1.msra.mxu0 0.0
      %1292 = vmatprep.subr.mxu0 0.0
      %1293 = vmatpush1.msra.mxu0 0.0
      %1294 = vmatprep.subr.mxu0 0.0
      %1295 = vmatpush1.msra.mxu0 0.0
      %1296 = vmatprep.subr.mxu0 0.0
      %1297 = vmatpush1.msra.mxu0 0.0
      %1298 = vmatprep.subr.mxu0 0.0
      %1299 = vmatpush1.msra.mxu0 0.0
      %1300 = vmatprep.subr.mxu0 0.0
      %1301 = vmatpush1.msra.mxu0 0.0
      %1302 = vmatprep.subr.mxu0 0.0
      %1303 = vmatpush1.msra.mxu0 0.0
      %1304 = vmatprep.subr.mxu0 0.0
      %1305 = vmatpush1.msra.mxu0 0.0
      %1306 = vmatprep.subr.mxu0 0.0
      %1307 = vmatpush1.msra.mxu0 0.0
      %1308 = vmatprep.subr.mxu0 0.0
      %1309 = vmatpush1.msra.mxu0 0.0
      %1310 = vmatprep.subr.mxu0 0.0
      %1311 = vmatpush1.msra.mxu0 0.0
      %1312 = vmatprep.subr.mxu0 0.0
      %1313 = vmatpush1.msra.mxu0 0.0
      %1314 = vmatprep.subr.mxu0 0.0
      %1315 = vmatpush1.msra.mxu0 0.0
      %1316 = vmatprep.subr.mxu0 0.0
      %1317 = vmatpush1.msra.mxu0 0.0
      %1318 = vmatprep.subr.mxu0 0.0
      %1319 = vmatpush1.msra.mxu0 0.0
      %1320 = vmatprep.subr.mxu0 0.0
      %1321 = vmatpush1.msra.mxu0 0.0
      %1322 = vmatprep.subr.mxu0 0.0
      %1323 = vmatpush1.msra.mxu0 0.0
      %1324 = vmatprep.subr.mxu0 0.0
      %1325 = vmatpush1.msra.mxu0 0.0
      %1326 = vmatprep.subr.mxu0 0.0
      %1327 = vmatpush1.msra.mxu0 0.0
      %1328 = vmatprep.subr.mxu0 0.0
      %1329 = vmatpush1.msra.mxu0 0.0
      %1330 = vmatprep.subr.mxu0 0.0
      %1331 = vmatpush1.msra.mxu0 0.0
      %1332 = vmatprep.mubr.f32.mxu0 0.0
      %1333 = vmatmul.mubr.f32.gmra.mrb[0].mxu0 %v1243
      %v1334 = vpop.f32.mrb[0].mxu0
      %v1335 = vadd.f32 0.0, %v1334
      %v1336 = vpop.f32.mrb[0].mxu0
      %1337 = vmatprep.mubr.f32.mxu0 0.0
      %1338 = vmatmul.mubr.f32.gmra.mrb[0].mxu0 %v1246
      %v1339 = vpop.f32.mrb[0].mxu0
      %v1340 = vadd.f32 0.0, %v1339
      %v1341 = vpop.f32.mrb[0].mxu0
      %1342 = vmatprep.mubr.f32.mxu0 0.0
      %1343 = vmatmul.mubr.f32.gmra.mrb[0].mxu0 %v1249
      %v1344 = vpop.f32.mrb[0].mxu0
      %v1345 = vadd.f32 0.0, %v1344
      %v1346 = vpop.f32.mrb[0].mxu0
      %1347 = vmatprep.mubr.f32.mxu0 0.0
      %1348 = vmatmul.mubr.f32.gmra.mrb[0].mxu0 %v1252
      %v1349 = vpop.f32.mrb[0].mxu0
      %v1350 = vadd.f32 0.0, %v1349
      %v1351 = vpop.f32.mrb[0].mxu0
      %1352 = vmatprep.mubr.f32.mxu0 0.0
      %1353 = vmatmul.mubr.f32.gmra.mrb[0].mxu0 %v1255
      %v1354 = vpop.f32.mrb[0].mxu0
      %v1355 = vadd.f32 0.0, %v1354
      %v1356 = vpop.f32.mrb[0].mxu0
      %1357 = vmatprep.mubr.f32.mxu0 0.0
      %1358 = vmatmul.mubr.f32.gmra.mrb[0].mxu0 %v1258
      %v1359 = vpop.f32.mrb[0].mxu0
      %v1360 = vadd.f32 0.0, %v1359
      %v1361 = vpop.f32.mrb[0].mxu0
      %1362 = vmatprep.mubr.f32.mxu0 0.0
      %1363 = vmatmul.mubr.f32.gmra.mrb[0].mxu0 %v1261
      %v1364 = vpop.f32.mrb[0].mxu0
      %v1365 = vadd.f32 0.0, %v1364
      %v1366 = vpop.f32.mrb[0].mxu0
      %1367 = vmatprep.mubr.f32.mxu0 0.0
      %1368 = vmatmul.mubr.f32.gmra.mrb[0].mxu0 %v1264
      %v1369 = vpop.f32.mrb[0].mxu0
      %v1370 = vadd.f32 0.0, %v1369
      %v1371 = vpop.f32.mrb[0].mxu0
      %1372 = vdwg.mxu0
      %v1374 = vsel %vm241, %v814, 0
      %v1377 = vsel %vm241, %v815, 0
      %v1380 = vsel %vm241, %v816, 0
      %v1383 = vsel %vm241, %v817, 0
      %v1386 = vsel %vm241, %v818, 0
      %v1389 = vsel %vm241, %v819, 0
      %v1392 = vsel %vm241, %v820, 0
      %v1395 = vsel %vm241, %v821, 0
      %v1397 = vsel %vm266, %v394, 0
      %1399 = vmatprep.subr.mxu0 0.0
      %1400 = vmatpush1.msra.mxu0 %v1397
      %1401 = vmatprep.subr.mxu0 0.0
      %1402 = vmatpush1.msra.mxu0 0.0
      %1403 = vmatprep.subr.mxu0 0.0
      %1404 = vmatpush1.msra.mxu0 0.0
      %1405 = vmatprep.subr.mxu0 0.0
      %1406 = vmatpush1.msra.mxu0 0.0
      %1407 = vmatprep.subr.mxu0 0.0
      %1408 = vmatpush1.msra.mxu0 0.0
      %1409 = vmatprep.subr.mxu0 0.0
      %1410 = vmatpush1.msra.mxu0 0.0
      %1411 = vmatprep.subr.mxu0 0.0
      %1412 = vmatpush1.msra.mxu0 0.0
      %1413 = vmatprep.subr.mxu0 0.0
      %1414 = vmatpush1.msra.mxu0 0.0
      %1415 = vmatprep.subr.mxu0 0.0
      %1416 = vmatpush1.msra.mxu0 0.0
      %1417 = vmatprep.subr.mxu0 0.0
      %1418 = vmatpush1.msra.mxu0 0.0
      %1419 = vmatprep.subr.mxu0 0.0
      %1420 = vmatpush1.msra.mxu0 0.0
      %1421 = vmatprep.subr.mxu0 0.0
      %1422 = vmatpush1.msra.mxu0 0.0
      %1423 = vmatprep.subr.mxu0 0.0
      %1424 = vmatpush1.msra.mxu0 0.0
      %1425 = vmatprep.subr.mxu0 0.0
      %1426 = vmatpush1.msra.mxu0 0.0
      %1427 = vmatprep.subr.mxu0 0.0
      %1428 = vmatpush1.msra.mxu0 0.0
      %1429 = vmatprep.subr.mxu0 0.0
      %1430 = vmatpush1.msra.mxu0 0.0
      %1431 = vmatprep.subr.mxu0 0.0
      %1432 = vmatpush1.msra.mxu0 0.0
      %1433 = vmatprep.subr.mxu0 0.0
      %1434 = vmatpush1.msra.mxu0 0.0
      %1435 = vmatprep.subr.mxu0 0.0
      %1436 = vmatpush1.msra.mxu0 0.0
      %1437 = vmatprep.subr.mxu0 0.0
      %1438 = vmatpush1.msra.mxu0 0.0
      %1439 = vmatprep.subr.mxu0 0.0
      %1440 = vmatpush1.msra.mxu0 0.0
      %1441 = vmatprep.subr.mxu0 0.0
      %1442 = vmatpush1.msra.mxu0 0.0
      %1443 = vmatprep.subr.mxu0 0.0
      %1444 = vmatpush1.msra.mxu0 0.0
      %1445 = vmatprep.subr.mxu0 0.0
      %1446 = vmatpush1.msra.mxu0 0.0
      %1447 = vmatprep.subr.mxu0 0.0
      %1448 = vmatpush1.msra.mxu0 0.0
      %1449 = vmatprep.subr.mxu0 0.0
      %1450 = vmatpush1.msra.mxu0 0.0
      %1451 = vmatprep.subr.mxu0 0.0
      %1452 = vmatpush1.msra.mxu0 0.0
      %1453 = vmatprep.subr.mxu0 0.0
      %1454 = vmatpush1.msra.mxu0 0.0
      %1455 = vmatprep.subr.mxu0 0.0
      %1456 = vmatpush1.msra.mxu0 0.0
      %1457 = vmatprep.subr.mxu0 0.0
      %1458 = vmatpush1.msra.mxu0 0.0
      %1459 = vmatprep.subr.mxu0 0.0
      %1460 = vmatpush1.msra.mxu0 0.0
      %1461 = vmatprep.subr.mxu0 0.0
      %1462 = vmatpush1.msra.mxu0 0.0
      %1463 = vmatprep.mubr.f32.mxu0 0.0
      %1464 = vmatmul.mubr.f32.gmra.mrb[0].mxu0 %v1374
      %v1465 = vpop.f32.mrb[0].mxu0
      %v1466 = vadd.f32 %v1335, %v1465
      %v1467 = vpop.f32.mrb[0].mxu0
      %1468 = vmatprep.mubr.f32.mxu0 0.0
      %1469 = vmatmul.mubr.f32.gmra.mrb[0].mxu0 %v1377
      %v1470 = vpop.f32.mrb[0].mxu0
      %v1471 = vadd.f32 %v1340, %v1470
      %v1472 = vpop.f32.mrb[0].mxu0
      %1473 = vmatprep.mubr.f32.mxu0 0.0
      %1474 = vmatmul.mubr.f32.gmra.mrb[0].mxu0 %v1380
      %v1475 = vpop.f32.mrb[0].mxu0
      %v1476 = vadd.f32 %v1345, %v1475
      %v1477 = vpop.f32.mrb[0].mxu0
      %1478 = vmatprep.mubr.f32.mxu0 0.0
      %1479 = vmatmul.mubr.f32.gmra.mrb[0].mxu0 %v1383
      %v1480 = vpop.f32.mrb[0].mxu0
      %v1481 = vadd.f32 %v1350, %v1480
      %v1482 = vpop.f32.mrb[0].mxu0
      %1483 = vmatprep.mubr.f32.mxu0 0.0
      %1484 = vmatmul.mubr.f32.gmra.mrb[0].mxu0 %v1386
      %v1485 = vpop.f32.mrb[0].mxu0
      %v1486 = vadd.f32 %v1355, %v1485
      %v1487 = vpop.f32.mrb[0].mxu0
      %1488 = vmatprep.mubr.f32.mxu0 0.0
      %1489 = vmatmul.mubr.f32.gmra.mrb[0].mxu0 %v1389
      %v1490 = vpop.f32.mrb[0].mxu0
      %v1491 = vadd.f32 %v1360, %v1490
      %v1492 = vpop.f32.mrb[0].mxu0
      %1493 = vmatprep.mubr.f32.mxu0 0.0
      %1494 = vmatmul.mubr.f32.gmra.mrb[0].mxu0 %v1392
      %v1495 = vpop.f32.mrb[0].mxu0
      %v1496 = vadd.f32 %v1365, %v1495
      %v1497 = vpop.f32.mrb[0].mxu0
      %1498 = vmatprep.mubr.f32.mxu0 0.0
      %1499 = vmatmul.mubr.f32.gmra.mrb[0].mxu0 %v1395
      %v1500 = vpop.f32.mrb[0].mxu0
      %v1501 = vadd.f32 %v1370, %v1500
      %v1502 = vpop.f32.mrb[0].mxu0
      %1503 = vdwg.mxu0
      %v1504 = vld [vmem:[%s4] sm:$0x1]
      %v1506 = vlaneseq
      %v1507 = vshrl.u32 %v1506, 7
      %v1508 = vsub.s32 0, %v1507
      %v1509 = vrot.slane %v1504, %v1508
      %v1511 = vadd.f32 %v1466, %v1509
      %v1512 = vadd.f32 %v1471, %v1509
      %v1513 = vadd.f32 %v1476, %v1509
      %v1514 = vadd.f32 %v1481, %v1509
      %v1515 = vadd.f32 %v1486, %v1509
      %v1516 = vadd.f32 %v1491, %v1509
      %v1517 = vadd.f32 %v1496, %v1509
      %v1518 = vadd.f32 %v1501, %v1509
      %1519 = vst.msk [vmem:[%s224] sm:$0xff] %vm241, %v1511
      %1520 = vst.msk [vmem:[%s224 + $0x8] sm:$0xff] %vm241, %v1512
      %1521 = vst.msk [vmem:[%s224 + $0x10] sm:$0xff] %vm241, %v1513
      %1522 = vst.msk [vmem:[%s224 + $0x18] sm:$0xff] %vm241, %v1514
      %1523 = vst.msk [vmem:[%s224 + $0x20] sm:$0xff] %vm241, %v1515
      %1524 = vst.msk [vmem:[%s224 + $0x28] sm:$0xff] %vm241, %v1516
      %1525 = vst.msk [vmem:[%s224 + $0x30] sm:$0xff] %vm241, %v1517
      %1526 = vst.msk [vmem:[%s224 + $0x38] sm:$0xff] %vm241, %v1518
      %p1527 = scmp.lt.s32.totalorder %s16, 1
      %s1528 = scalar_select %p1527, %s16, 1
      %s1529 = smul.addr %s1528, 8
      %s1530 = smul.addr %s1529, 8
      %s1531 = scalar_lea.vmem %s5, %s1530
      // Predicated region
      $region41: #{tpu_custom_call.1} parent=39 // pred_check
        %p1532 = pneg %p144
      $region42: #{tpu_custom_call.1} parent=39 // pred_check_branch
        %1534 = sbr.rel (%p1532) target = $region44
      $region43: #{tpu_custom_call.1} parent=39 // pred_region
        _
      $region44: #{tpu_custom_call.1} parent=39 // pred_fallthru
        _
    $region40: #{tpu_custom_call.1} parent=5 // pred_fallthru
      _
    %p1535 = scmp.le.s32.totalorder 2, %s11
    // Predicated region
    $region45: #{tpu_custom_call.1} parent=5 // pred_check
      %p1536 = pneg %p1535
    $region46: #{tpu_custom_call.1} parent=5 // pred_check_branch
      %1538 = sbr.rel (%p1536) target = $region48
    $region47: #{tpu_custom_call.1} parent=5 // pred_region
      %s1539 = ssub.s32 %s11, 2
      // Predicated region
      $region49: #{tpu_custom_call.1} parent=47 // pred_check
        %p1540 = pneg %p150
      $region50: #{tpu_custom_call.1} parent=47 // pred_check_branch
        %1542 = sbr.rel (%p1540) target = $region52
      $region51: #{tpu_custom_call.1} parent=47 // pred_region
        %p1543 = scmp.lt.s32.totalorder %s17, 1
        %s1544 = scalar_select %p1543, %s17, 1
        %s1545 = smul.addr %s1544, 8
        %s1546 = smul.addr %s1545, 8
        %s1547 = scalar_lea.vmem %s5, %s1546
      $region52: #{tpu_custom_call.1} parent=47 // pred_fallthru
        _
    $region48: #{tpu_custom_call.1} parent=5 // pred_fallthru
      _
  $region6: #{tpu_custom_call.1} parent=0 // loop_footer
    %s15 = sadd.s32 1, %s11
  $region7: #{tpu_custom_call.1} parent=0 // loop_footer_branch
    %10 = sbr.rel target = $region3
  $region8: #{tpu_custom_call.1} parent=0 // loop_exit
    _

</llo_original>
